<compile_context>
chip_gen: v6e
topology: v6e:2x2x1
jax: 0.10.0
libtpu: 0.0.40
codegen_flags: <defaults>
</compile_context>

<pallas_src>
import jax
import jax.numpy as jnp
from jax.experimental import pallas as pl
from jax.experimental.pallas import tpu as pltpu


def ffn_kernel(x_ref, w1_ref, b1_ref, w2_ref, b2_ref, o_ref):
    # x_ref: (TILE_M, D) bf16   w1_ref: (D, H) bf16   b1_ref: (1, H) f32
    # w2_ref: (H, D) bf16       b2_ref: (1, D) f32    o_ref: (TILE_M, D) f32
    x = x_ref[...]

    # First linear (MXU, bf16 inputs, f32 accumulate) + bias + ReLU.
    h = jnp.dot(x, w1_ref[...], preferred_element_type=jnp.float32) + b1_ref[...]
    h = jnp.maximum(h, 0.0)

    # Dropout: identity (inference mode).

    # Second linear: cast the activation back to bf16 for the MXU, accumulate f32.
    out = jnp.dot(h.astype(jnp.bfloat16), w2_ref[...],
                  preferred_element_type=jnp.float32) + b2_ref[...]
    o_ref[...] = out.astype(o_ref.dtype)


def feed_forward(x, w1, b1, w2, b2, *, tile_m=256):
    """x: (batch, seq, D) float32 -> (batch, seq, D) float32.

    w1: (D, H), b1: (H,), w2: (H, D), b2: (D,) float32 parameters
    (cast to bf16 at the kernel boundary for DMA/MXU efficiency).
    """
    batch, seq, d = x.shape
    m = batch * seq
    h = w1.shape[1]

    # bf16 at the boundary: halves x-tile DMA and weight DMA; accumulation stays f32.
    x2d = x.reshape(m, d).astype(jnp.bfloat16)
    w1_b = w1.astype(jnp.bfloat16)
    w2_b = w2.astype(jnp.bfloat16)
    b1_2d = b1.reshape(1, h).astype(jnp.float32)
    b2_2d = b2.reshape(1, d).astype(jnp.float32)

    # TILE_M: 256 rows is a good default (review: 256-512). For small problems use
    # the whole M (kept a multiple of 8 by the caller where possible).
    tm = min(tile_m, m)
    grid = (pl.cdiv(m, tm),)

    out2d = pl.pallas_call(
        ffn_kernel,
        out_shape=jax.ShapeDtypeStruct((m, d), jnp.float32),
        grid_spec=pltpu.PrefetchScalarGridSpec(
            num_scalar_prefetch=0,
            grid=grid,
            in_specs=[
                pl.BlockSpec((tm, d), lambda i: (i, 0)),   # x: streams with the M tile
                pl.BlockSpec((d, h), lambda i: (0, 0)),    # w1: VMEM-resident
                pl.BlockSpec((1, h), lambda i: (0, 0)),    # b1: VMEM-resident
                pl.BlockSpec((h, d), lambda i: (0, 0)),    # w2: VMEM-resident
                pl.BlockSpec((1, d), lambda i: (0, 0)),    # b2: VMEM-resident
            ],
            out_specs=pl.BlockSpec((tm, d), lambda i: (i, 0)),
        ),
        compiler_params=pltpu.CompilerParams(
            # M tiles are independent -> shardable across TensorCores (v7x megacore).
            dimension_semantics=("parallel",),
            # Explicit scoped-VMEM budget: resident bf16 weights + double-buffered
            # x/out tiles + (TILE_M, H) f32 intermediate. 48 MiB fits every
            # generation (v7x: 64 MiB physical).
            vmem_limit_bytes=48 * 1024 * 1024,
        ),
    )(x2d, w1_b, b1_2d, w2_b, b2_2d)

    return out2d.reshape(batch, seq, d)


def init_params(key, embedding_dim, inner_dim):
    """Deterministic init mimicking PyTorch nn.Linear (uniform +-1/sqrt(fan_in)),
    stored as (in_features, out_features)."""
    k1, k2, k3, k4 = jax.random.split(key, 4)
    bound1 = 1.0 / (embedding_dim ** 0.5)
    bound2 = 1.0 / (inner_dim ** 0.5)
    w1 = jax.random.uniform(k1, (embedding_dim, inner_dim), jnp.float32,
                            minval=-bound1, maxval=bound1)
    b1 = jax.random.uniform(k2, (inner_dim,), jnp.float32,
                            minval=-bound1, maxval=bound1)
    w2 = jax.random.uniform(k3, (inner_dim, embedding_dim), jnp.float32,
                            minval=-bound2, maxval=bound2)
    b2 = jax.random.uniform(k4, (embedding_dim,), jnp.float32,
                            minval=-bound2, maxval=bound2)
    return w1, b1, w2, b2


if __name__ == "__main__":
    embedding_dim = 32
    inner_dim = 2048      # fixed in the module __init__
    batch, seq = 2, 8     # M = 16 rows

    key = jax.random.PRNGKey(0)
    kx, kp = jax.random.split(key)
    x = jax.random.normal(kx, (batch, seq, embedding_dim), jnp.float32)
    w1, b1, w2, b2 = init_params(kp, embedding_dim, inner_dim)

    # Use tile_m=8 here so the small test still exercises the multi-tile,
    # pipelined grid path (grid=(2,)). Production callers use the default 256.
    out = feed_forward(x, w1, b1, w2, b2, tile_m=8)
    out = jax.block_until_ready(out)

    # Pure-JAX f32 reference (dropout is identity in eval mode). Tolerance is
    # loosened slightly because the kernel runs the matmuls in bf16 with f32 acc.
    ref = jnp.maximum(x.reshape(-1, embedding_dim) @ w1 + b1, 0.0) @ w2 + b2
    ref = ref.reshape(batch, seq, embedding_dim)
    assert out.shape == (batch, seq, embedding_dim)
    assert jnp.allclose(out, ref, atol=2e-2, rtol=2e-2), (
        float(jnp.max(jnp.abs(out - ref))))

    print("KERNEL_OK")
</pallas_src>

<mosaic_0001>
module attributes {stable_mosaic.version = 11 : i64} {
  func.func @ffn_kernel(%arg0: i32, %arg1: memref<8x32xbf16, #tpu.memory_space<vmem>>, %arg2: memref<32x2048xbf16, #tpu.memory_space<vmem>>, %arg3: memref<1x2048xf32, #tpu.memory_space<vmem>>, %arg4: memref<2048x32xbf16, #tpu.memory_space<vmem>>, %arg5: memref<1x32xf32, #tpu.memory_space<vmem>>, %arg6: memref<8x32xf32, #tpu.memory_space<vmem>>) attributes {dimension_semantics = [#tpu.dimension_semantics<parallel>], iteration_bounds = array<i64: 2>, scalar_prefetch = 0 : i64, scratch_operands = 0 : i64, tpu.core_type = #tpu.core_type<tc>, window_params = [{transform_indices = @transform_0, window_bounds = array<i64: 8, 32>}, {pipeline_mode = #tpu.pipeline_mode<synchronous>, transform_indices = @transform_1, window_bounds = array<i64: 32, 2048>}, {pipeline_mode = #tpu.pipeline_mode<synchronous>, transform_indices = @transform_2, window_bounds = array<i64: 1, 2048>}, {pipeline_mode = #tpu.pipeline_mode<synchronous>, transform_indices = @transform_3, window_bounds = array<i64: 2048, 32>}, {pipeline_mode = #tpu.pipeline_mode<synchronous>, transform_indices = @transform_4, window_bounds = array<i64: 1, 32>}, {transform_indices = @transform_5, window_bounds = array<i64: 8, 32>}]} {
    %c0 = arith.constant 0 : index
    %c0_0 = arith.constant 0 : index
    %0 = vector.load %arg1[%c0, %c0_0] : memref<8x32xbf16, #tpu.memory_space<vmem>>, vector<8x32xbf16>
    %c0_1 = arith.constant 0 : index
    %c0_2 = arith.constant 0 : index
    %1 = vector.load %arg2[%c0_1, %c0_2] : memref<32x2048xbf16, #tpu.memory_space<vmem>>, vector<32x2048xbf16>
    %cst = arith.constant dense<0.000000e+00> : vector<8x2048xf32>
    %2 = tpu.matmul %0, %1, %cst {dimension_numbers = #tpu.dot_dimension_numbers<[1], [0], [0], [1], [0, 0, 1, 1], [], []>} : vector<8x32xbf16>, vector<32x2048xbf16>, vector<8x2048xf32> -> vector<8x2048xf32>
    %c0_3 = arith.constant 0 : index
    %c0_4 = arith.constant 0 : index
    %3 = vector.load %arg3[%c0_3, %c0_4] : memref<1x2048xf32, #tpu.memory_space<vmem>>, vector<1x2048xf32>
    %4 = vector.broadcast %3 : vector<1x2048xf32> to vector<8x2048xf32>
    %5 = arith.addf %2, %4 : vector<8x2048xf32>
    %cst_5 = arith.constant 0.000000e+00 : f32
    %6 = vector.broadcast %cst_5 : f32 to vector<8x2048xf32>
    %7 = arith.maximumf %5, %6 : vector<8x2048xf32>
    %8 = arith.truncf %7 : vector<8x2048xf32> to vector<8x2048xbf16>
    %c0_6 = arith.constant 0 : index
    %c0_7 = arith.constant 0 : index
    %9 = vector.load %arg4[%c0_6, %c0_7] : memref<2048x32xbf16, #tpu.memory_space<vmem>>, vector<2048x32xbf16>
    %cst_8 = arith.constant dense<0.000000e+00> : vector<8x32xf32>
    %10 = tpu.matmul %8, %9, %cst_8 {dimension_numbers = #tpu.dot_dimension_numbers<[1], [0], [0], [1], [0, 0, 1, 1], [], []>} : vector<8x2048xbf16>, vector<2048x32xbf16>, vector<8x32xf32> -> vector<8x32xf32>
    %c0_9 = arith.constant 0 : index
    %c0_10 = arith.constant 0 : index
    %11 = vector.load %arg5[%c0_9, %c0_10] : memref<1x32xf32, #tpu.memory_space<vmem>>, vector<1x32xf32>
    %12 = vector.broadcast %11 : vector<1x32xf32> to vector<8x32xf32>
    %13 = arith.addf %10, %12 : vector<8x32xf32>
    %c0_11 = arith.constant 0 : index
    %c0_12 = arith.constant 0 : index
    %14 = vector.load %arg6[%c0_11, %c0_12] : memref<8x32xf32, #tpu.memory_space<vmem>>, vector<8x32xf32>
    tpu.vector_store %arg6[%c0_11, %c0_12], %13 {strides = array<i32>} : memref<8x32xf32, #tpu.memory_space<vmem>>, vector<8x32xf32>,
    return
  }
  func.func @transform_0(%arg0: i32) -> (i32, i32) {
    %c0_i32 = arith.constant 0 : i32
    %c0_i32_0 = arith.constant 0 : i32
    return %arg0, %c0_i32 : i32, i32
  }
  func.func @transform_1(%arg0: i32) -> (i32, i32) {
    %c0_i32 = arith.constant 0 : i32
    %c0_i32_0 = arith.constant 0 : i32
    %c0_i32_1 = arith.constant 0 : i32
    return %c0_i32, %c0_i32_0 : i32, i32
  }
  func.func @transform_2(%arg0: i32) -> (i32, i32) {
    %c0_i32 = arith.constant 0 : i32
    %c0_i32_0 = arith.constant 0 : i32
    %c0_i32_1 = arith.constant 0 : i32
    return %c0_i32, %c0_i32_0 : i32, i32
  }
  func.func @transform_3(%arg0: i32) -> (i32, i32) {
    %c0_i32 = arith.constant 0 : i32
    %c0_i32_0 = arith.constant 0 : i32
    %c0_i32_1 = arith.constant 0 : i32
    return %c0_i32, %c0_i32_0 : i32, i32
  }
  func.func @transform_4(%arg0: i32) -> (i32, i32) {
    %c0_i32 = arith.constant 0 : i32
    %c0_i32_0 = arith.constant 0 : i32
    %c0_i32_1 = arith.constant 0 : i32
    return %c0_i32, %c0_i32_0 : i32, i32
  }
  func.func @transform_5(%arg0: i32) -> (i32, i32) {
    %c0_i32 = arith.constant 0 : i32
    %c0_i32_0 = arith.constant 0 : i32
    return %arg0, %c0_i32 : i32, i32
  }
}

</mosaic_0001>

<llo_original>
// kernel: tpu_custom_call.1
$region0: #{tpu_custom_call.1}
  #allocation0 [shape = 'u32[]', space=smem, size = 0x4, offset = 0x4, fixed_abs, tag = 'smem constant byte address 0x4 - core index']
  #allocation1 [shape = 'u32[144,128]{1,0:T(1,128)}', space=vmem, size = 0x12000, scoped, tag = 'internal scratch']
  %s0 = inlined_call_operand.vmem [shape: bf16[16,32], index: 0, kind: input, shape index: {}]
  %s1 = inlined_call_operand.vmem [shape: bf16[32,2048], index: 1, kind: input, shape index: {}]
  %s2 = inlined_call_operand.vmem [shape: f32[1,2048], index: 2, kind: input, shape index: {}]
  %s3 = inlined_call_operand.vmem [shape: bf16[2048,32], index: 3, kind: input, shape index: {}]
  %s4 = inlined_call_operand.vmem [shape: f32[1,32], index: 4, kind: input, shape index: {}]
  %s5 = inlined_call_operand.hbm [shape: f32[16,32], index: 5, kind: output, shape index: {}]
  %s6 = sld [smem:[#allocation0]]
  $region53: #{tpu_custom_call.1} parent=0
    _
  %s8 = ssub.s32 1, %s6
  %s9 = scalar_select 0, %s8, %s6
  $region1: #{tpu_custom_call.1} parent=0
    #allocation2 [shape = 'u8[8192]{0}', space=vmem, size = 0x2000, scoped, tag = 'output window, operand 0']
    #allocation3 [shape = 's32[2]{0}', space=sflag, size = 0x8, scoped, tag = 'scoped memory for tpu_custom_call.1']
    %10 = vsyncpa [#allocation3], 0
    %s11 = scalar_lea.sflag [#allocation3], 1
    %12 = vsyncpa %s11, 0
    loop: start=0, step=1, limit=4
    $region2: #{tpu_custom_call.1} parent=1 // loop_pre_header
      _
    $region3: #{tpu_custom_call.1} parent=1 // loop_header
      %s14 = sphi 0, %s18
      %p15 = scmp.ge.s32.totalorder %s14, 4
      %s24 = sphi 0, %s26
      %s27 = sphi 0, %s24
      %s28 = sphi 0, %s27
      %s44 = sphi 0, %s28
      %s48 = sphi 0, %s48
      %s50 = sphi 0, %s48
      %s51 = sphi 0, %s50
      %s65 = sphi 0, %s51
      %s69 = sphi 0, %s69
      %s71 = sphi 0, %s69
      %s72 = sphi 0, %s71
      %s86 = sphi 0, %s72
      %s90 = sphi 0, %s90
      %s92 = sphi 0, %s90
      %s93 = sphi 0, %s92
      %s107 = sphi 0, %s93
      %s111 = sphi 0, %s111
      %s113 = sphi 0, %s111
      %s114 = sphi 0, %s113
      %s128 = sphi 0, %s114
      %s134 = sphi 0, %s136
      %s137 = sphi 0, %s134
      %s138 = sphi 0, %s137
      %s154 = sphi 0, %s138
    $region4: #{tpu_custom_call.1} parent=1 // loop_header_branch
      %17 = sbr.rel (%p15) target = $region8
    $region5: #{tpu_custom_call.1} parent=1 // loop_body
      %s19 = ssub.s32 %s14, 1
      %s20 = ssub.s32 %s14, 2
      %s21 = sadd.s32 %s14, 1
      %s22 = ssub.s32 %s14, %s21
      %p23 = scmp.eq.s32.totalorder %s22, 0
      %s25 = sadd.s32 %s24, 1
      %s26 = scalar_select %p23, %s24, %s25
      %p29 = pneg %p23
      %p30 = scmp.eq.s32.totalorder %s14, 1
      %p31 = por %p29, %p30
      %p32 = scmp.ne.s32.totalorder %s24, %s27
      %p33 = scmp.eq.s32.totalorder %s14, 0
      %p34 = por %p32, %p33
      %p35 = scmp.ne.s32.totalorder %s24, %s27
      %p36 = scmp.eq.s32.totalorder %s19, 1
      %p37 = por %p35, %p36
      %p38 = scmp.ne.s32.totalorder %s27, %s28
      %p39 = scmp.eq.s32.totalorder %s19, 0
      %p40 = por %p38, %p39
      %p41 = scmp.ne.s32.totalorder %s27, %s28
      %p42 = scmp.eq.s32.totalorder %s20, 1
      %p43 = por %p41, %p42
      %p45 = scmp.ne.s32.totalorder %s28, %s44
      %p46 = scmp.eq.s32.totalorder %s20, 0
      %p47 = por %p45, %p46
      %s49 = sadd.s32 %s48, 1
      %p52 = scmp.eq.s32.totalorder %s14, 1
      %p53 = scmp.ne.s32.totalorder %s48, %s50
      %p54 = scmp.eq.s32.totalorder %s14, 0
      %p55 = por %p53, %p54
      %p56 = scmp.ne.s32.totalorder %s48, %s50
      %p57 = scmp.eq.s32.totalorder %s19, 1
      %p58 = por %p56, %p57
      %p59 = scmp.ne.s32.totalorder %s50, %s51
      %p60 = scmp.eq.s32.totalorder %s19, 0
      %p61 = por %p59, %p60
      %p62 = scmp.ne.s32.totalorder %s50, %s51
      %p63 = scmp.eq.s32.totalorder %s20, 1
      %p64 = por %p62, %p63
      %p66 = scmp.ne.s32.totalorder %s51, %s65
      %p67 = scmp.eq.s32.totalorder %s20, 0
      %p68 = por %p66, %p67
      %s70 = sadd.s32 %s69, 1
      %p73 = scmp.eq.s32.totalorder %s14, 1
      %p74 = scmp.ne.s32.totalorder %s69, %s71
      %p75 = scmp.eq.s32.totalorder %s14, 0
      %p76 = por %p74, %p75
      %p77 = scmp.ne.s32.totalorder %s69, %s71
      %p78 = scmp.eq.s32.totalorder %s19, 1
      %p79 = por %p77, %p78
      %p80 = scmp.ne.s32.totalorder %s71, %s72
      %p81 = scmp.eq.s32.totalorder %s19, 0
      %p82 = por %p80, %p81
      %p83 = scmp.ne.s32.totalorder %s71, %s72
      %p84 = scmp.eq.s32.totalorder %s20, 1
      %p85 = por %p83, %p84
      %p87 = scmp.ne.s32.totalorder %s72, %s86
      %p88 = scmp.eq.s32.totalorder %s20, 0
      %p89 = por %p87, %p88
      %s91 = sadd.s32 %s90, 1
      %p94 = scmp.eq.s32.totalorder %s14, 1
      %p95 = scmp.ne.s32.totalorder %s90, %s92
      %p96 = scmp.eq.s32.totalorder %s14, 0
      %p97 = por %p95, %p96
      %p98 = scmp.ne.s32.totalorder %s90, %s92
      %p99 = scmp.eq.s32.totalorder %s19, 1
      %p100 = por %p98, %p99
      %p101 = scmp.ne.s32.totalorder %s92, %s93
      %p102 = scmp.eq.s32.totalorder %s19, 0
      %p103 = por %p101, %p102
      %p104 = scmp.ne.s32.totalorder %s92, %s93
      %p105 = scmp.eq.s32.totalorder %s20, 1
      %p106 = por %p104, %p105
      %p108 = scmp.ne.s32.totalorder %s93, %s107
      %p109 = scmp.eq.s32.totalorder %s20, 0
      %p110 = por %p108, %p109
      %s112 = sadd.s32 %s111, 1
      %p115 = scmp.eq.s32.totalorder %s14, 1
      %p116 = scmp.ne.s32.totalorder %s111, %s113
      %p117 = scmp.eq.s32.totalorder %s14, 0
      %p118 = por %p116, %p117
      %p119 = scmp.ne.s32.totalorder %s111, %s113
      %p120 = scmp.eq.s32.totalorder %s19, 1
      %p121 = por %p119, %p120
      %p122 = scmp.ne.s32.totalorder %s113, %s114
      %p123 = scmp.eq.s32.totalorder %s19, 0
      %p124 = por %p122, %p123
      %p125 = scmp.ne.s32.totalorder %s113, %s114
      %p126 = scmp.eq.s32.totalorder %s20, 1
      %p127 = por %p125, %p126
      %p129 = scmp.ne.s32.totalorder %s114, %s128
      %p130 = scmp.eq.s32.totalorder %s20, 0
      %p131 = por %p129, %p130
      %s132 = ssub.s32 %s14, %s21
      %p133 = scmp.eq.s32.totalorder %s132, 0
      %s135 = sadd.s32 %s134, 1
      %s136 = scalar_select %p133, %s134, %s135
      %p139 = pneg %p133
      %p140 = scmp.eq.s32.totalorder %s14, 1
      %p141 = por %p139, %p140
      %p142 = scmp.ne.s32.totalorder %s134, %s137
      %p143 = scmp.eq.s32.totalorder %s14, 0
      %p144 = por %p142, %p143
      %p145 = scmp.ne.s32.totalorder %s134, %s137
      %p146 = scmp.eq.s32.totalorder %s19, 1
      %p147 = por %p145, %p146
      %p148 = scmp.ne.s32.totalorder %s137, %s138
      %p149 = scmp.eq.s32.totalorder %s19, 0
      %p150 = por %p148, %p149
      %p151 = scmp.ne.s32.totalorder %s137, %s138
      %p152 = scmp.eq.s32.totalorder %s20, 1
      %p153 = por %p151, %p152
      %p155 = scmp.ne.s32.totalorder %s138, %s154
      %p156 = scmp.eq.s32.totalorder %s20, 0
      %p157 = por %p155, %p156
      %p158 = scmp.le.s32.totalorder 1, %s14
      %p159 = scmp.lt.s32.totalorder %s14, 3
      %p160 = pnand %p158, %p159
      %p161 = pneg %p160
      // Predicated region
      $region9: #{tpu_custom_call.1} parent=5 // pred_check
        _
      $region10: #{tpu_custom_call.1} parent=5 // pred_check_branch
        %163 = sbr.rel (%p160) target = $region12
      $region11: #{tpu_custom_call.1} parent=5 // pred_region
        %s164 = ssub.s32 %s14, 1
        // Predicated region
        $region13: #{tpu_custom_call.1} parent=11 // pred_check
          %p165 = pneg %p61
        $region14: #{tpu_custom_call.1} parent=11 // pred_check_branch
          %167 = sbr.rel (%p165) target = $region16
        $region15: #{tpu_custom_call.1} parent=11 // pred_region
          _
        $region16: #{tpu_custom_call.1} parent=11 // pred_fallthru
          _
        // Predicated region
        $region17: #{tpu_custom_call.1} parent=11 // pred_check
          %p168 = pneg %p82
        $region18: #{tpu_custom_call.1} parent=11 // pred_check_branch
          %170 = sbr.rel (%p168) target = $region20
        $region19: #{tpu_custom_call.1} parent=11 // pred_region
          _
        $region20: #{tpu_custom_call.1} parent=11 // pred_fallthru
          _
        // Predicated region
        $region21: #{tpu_custom_call.1} parent=11 // pred_check
          %p171 = pneg %p103
        $region22: #{tpu_custom_call.1} parent=11 // pred_check_branch
          %173 = sbr.rel (%p171) target = $region24
        $region23: #{tpu_custom_call.1} parent=11 // pred_region
          _
        $region24: #{tpu_custom_call.1} parent=11 // pred_fallthru
          _
        // Predicated region
        $region25: #{tpu_custom_call.1} parent=11 // pred_check
          %p174 = pneg %p124
        $region26: #{tpu_custom_call.1} parent=11 // pred_check_branch
          %176 = sbr.rel (%p174) target = $region28
        $region27: #{tpu_custom_call.1} parent=11 // pred_region
          _
        $region28: #{tpu_custom_call.1} parent=11 // pred_fallthru
          _
      $region12: #{tpu_custom_call.1} parent=5 // pred_fallthru
        _
      %p177 = scmp.lt.s32.totalorder %s14, 2
      // Predicated region
      $region29: #{tpu_custom_call.1} parent=5 // pred_check
        %p178 = pneg %p177
      $region30: #{tpu_custom_call.1} parent=5 // pred_check_branch
        %180 = sbr.rel (%p178) target = $region32
      $region31: #{tpu_custom_call.1} parent=5 // pred_region
        // Predicated region
        $region33: #{tpu_custom_call.1} parent=31 // pred_check
          %p181 = pneg %p34
        $region34: #{tpu_custom_call.1} parent=31 // pred_check_branch
          %183 = sbr.rel (%p181) target = $region36
        $region35: #{tpu_custom_call.1} parent=31 // pred_region
          %p184 = scmp.lt.s32.totalorder %s14, 1
          %s185 = scalar_select %p184, %s14, 1
          %s186 = smul.addr %s185, 4
          %s187 = scalar_lea.vmem %s0, %s186
        $region36: #{tpu_custom_call.1} parent=31 // pred_fallthru
          _
      $region32: #{tpu_custom_call.1} parent=5 // pred_fallthru
        _
      %p188 = scmp.le.s32.totalorder 1, %s14
      %p189 = scmp.lt.s32.totalorder %s14, 3
      %p190 = pnand %p188, %p189
      %p191 = pneg %p190
      // Predicated region
      $region37: #{tpu_custom_call.1} parent=5 // pred_check
        _
      $region38: #{tpu_custom_call.1} parent=5 // pred_check_branch
        %193 = sbr.rel (%p190) target = $region40
      $region39: #{tpu_custom_call.1} parent=5 // pred_region
        %s194 = ssub.s32 %s14, 1
        %p195 = scmp.lt.s32.totalorder %s19, 1
        %s196 = scalar_select %p195, %s19, 1
        %s197 = smul.addr %s196, 4
        %s198 = scalar_lea.vmem %s0, %s197
        %p199 = pneg %p40
        %p200 = pneg %p37
        %p201 = pneg %p61
        %p202 = pneg %p58
        %p203 = pneg %p82
        %p204 = pneg %p79
        %p205 = pneg %p103
        %p206 = pneg %p100
        %p207 = pneg %p124
        %p208 = pneg %p121
        %p209 = pneg %p150
        %p210 = pneg %p147
        %s211 = sand.u32 %s137, 1
        %s212 = scalar_lea.sflag [#allocation3], %s211
        %s213 = sand.u32 %s137, 1
        %s214 = smul.addr %s213, 8
        %s215 = scalar_lea.vmem [#allocation2], %s214
        %p216 = scmp.lt.s32.totalorder %s19, 1
        %s217 = scalar_select %p216, %s19, 1
        %s218 = smul.addr %s217, 4
        %s219 = scalar_lea.vmem %s0, %s218
        %v221 = vld [vmem:[%s219] sm:$0xf]
        %v222 = vld [vmem:[%s1] sm:$0xff]
        %v223 = vld [vmem:[%s1 + $0x8] sm:$0xff]
        %v224 = vld [vmem:[%s1 + $0x10] sm:$0xff]
        %v225 = vld [vmem:[%s1 + $0x18] sm:$0xff]
        %v226 = vld [vmem:[%s1 + $0x20] sm:$0xff]
        %v227 = vld [vmem:[%s1 + $0x28] sm:$0xff]
        %v228 = vld [vmem:[%s1 + $0x30] sm:$0xff]
        %v229 = vld [vmem:[%s1 + $0x38] sm:$0xff]
        %v230 = vld [vmem:[%s1 + $0x40] sm:$0xff]
        %v231 = vld [vmem:[%s1 + $0x48] sm:$0xff]
        %v232 = vld [vmem:[%s1 + $0x50] sm:$0xff]
        %v233 = vld [vmem:[%s1 + $0x58] sm:$0xff]
        %v234 = vld [vmem:[%s1 + $0x60] sm:$0xff]
        %v235 = vld [vmem:[%s1 + $0x68] sm:$0xff]
        %v236 = vld [vmem:[%s1 + $0x70] sm:$0xff]
        %v237 = vld [vmem:[%s1 + $0x78] sm:$0xff]
        %v238 = vld [vmem:[%s1 + $0x80] sm:$0xff]
        %v239 = vld [vmem:[%s1 + $0x88] sm:$0xff]
        %v240 = vld [vmem:[%s1 + $0x90] sm:$0xff]
        %v241 = vld [vmem:[%s1 + $0x98] sm:$0xff]
        %v242 = vld [vmem:[%s1 + $0xa0] sm:$0xff]
        %v243 = vld [vmem:[%s1 + $0xa8] sm:$0xff]
        %v244 = vld [vmem:[%s1 + $0xb0] sm:$0xff]
        %v245 = vld [vmem:[%s1 + $0xb8] sm:$0xff]
        %v246 = vld [vmem:[%s1 + $0xc0] sm:$0xff]
        %v247 = vld [vmem:[%s1 + $0xc8] sm:$0xff]
        %v248 = vld [vmem:[%s1 + $0xd0] sm:$0xff]
        %v249 = vld [vmem:[%s1 + $0xd8] sm:$0xff]
        %v250 = vld [vmem:[%s1 + $0xe0] sm:$0xff]
        %v251 = vld [vmem:[%s1 + $0xe8] sm:$0xff]
        %v252 = vld [vmem:[%s1 + $0xf0] sm:$0xff]
        %v253 = vld [vmem:[%s1 + $0xf8] sm:$0xff]
        %v254 = vld [vmem:[%s2] sm:$0xff]
        %v255 = vld [vmem:[%s2 + $0x8] sm:$0xff]
        %v258 = vlaneseq
        %v259 = vshrl.u32 %v258, 7
        %v260 = vsub.s32 0, %v259
        %v261 = vrot.slane %v254, %v260
        %v262 = vlaneseq
        %v263 = vshrl.u32 %v262, 7
        %v264 = vsub.s32 1, %v263
        %v265 = vrot.slane %v254, %v264
        %v266 = vlaneseq
        %v267 = vshrl.u32 %v266, 7
        %v268 = vsub.s32 2, %v267
        %v269 = vrot.slane %v254, %v268
        %v270 = vlaneseq
        %v271 = vshrl.u32 %v270, 7
        %v272 = vsub.s32 3, %v271
        %v273 = vrot.slane %v254, %v272
        %v274 = vlaneseq
        %v275 = vshrl.u32 %v274, 7
        %v276 = vsub.s32 4, %v275
        %v277 = vrot.slane %v254, %v276
        %v278 = vlaneseq
        %v279 = vshrl.u32 %v278, 7
        %v280 = vsub.s32 5, %v279
        %v281 = vrot.slane %v254, %v280
        %v282 = vlaneseq
        %v283 = vshrl.u32 %v282, 7
        %v284 = vsub.s32 6, %v283
        %v285 = vrot.slane %v254, %v284
        %v286 = vlaneseq
        %v287 = vshrl.u32 %v286, 7
        %v288 = vsub.s32 7, %v287
        %v289 = vrot.slane %v254, %v288
        %v290 = vlaneseq
        %v291 = vshrl.u32 %v290, 7
        %v292 = vsub.s32 0, %v291
        %v293 = vrot.slane %v255, %v292
        %v294 = vlaneseq
        %v295 = vshrl.u32 %v294, 7
        %v296 = vsub.s32 1, %v295
        %v297 = vrot.slane %v255, %v296
        %v298 = vlaneseq
        %v299 = vshrl.u32 %v298, 7
        %v300 = vsub.s32 2, %v299
        %v301 = vrot.slane %v255, %v300
        %v302 = vlaneseq
        %v303 = vshrl.u32 %v302, 7
        %v304 = vsub.s32 3, %v303
        %v305 = vrot.slane %v255, %v304
        %v306 = vlaneseq
        %v307 = vshrl.u32 %v306, 7
        %v308 = vsub.s32 4, %v307
        %v309 = vrot.slane %v255, %v308
        %v310 = vlaneseq
        %v311 = vshrl.u32 %v310, 7
        %v312 = vsub.s32 5, %v311
        %v313 = vrot.slane %v255, %v312
        %v314 = vlaneseq
        %v315 = vshrl.u32 %v314, 7
        %v316 = vsub.s32 6, %v315
        %v317 = vrot.slane %v255, %v316
        %v318 = vlaneseq
        %v319 = vshrl.u32 %v318, 7
        %v320 = vsub.s32 7, %v319
        %v321 = vrot.slane %v255, %v320
        %v370 = vunpack.c.l.b16 %v222
        %v371 = vunpack.c.h.b16 %v222
        %v372 = vunpack.c.l.b16 %v223
        %v373 = vunpack.c.h.b16 %v223
        %v374 = vunpack.c.l.b16 %v224
        %v375 = vunpack.c.h.b16 %v224
        %v376 = vunpack.c.l.b16 %v225
        %v377 = vunpack.c.h.b16 %v225
        %v378 = vunpack.c.l.b16 %v226
        %v379 = vunpack.c.h.b16 %v226
        %v380 = vunpack.c.l.b16 %v227
        %v381 = vunpack.c.h.b16 %v227
        %v382 = vunpack.c.l.b16 %v228
        %v383 = vunpack.c.h.b16 %v228
        %v384 = vunpack.c.l.b16 %v229
        %v385 = vunpack.c.h.b16 %v229
        %v386 = vunpack.c.l.b16 %v230
        %v387 = vunpack.c.h.b16 %v230
        %v388 = vunpack.c.l.b16 %v231
        %v389 = vunpack.c.h.b16 %v231
        %v390 = vunpack.c.l.b16 %v232
        %v391 = vunpack.c.h.b16 %v232
        %v392 = vunpack.c.l.b16 %v233
        %v393 = vunpack.c.h.b16 %v233
        %v394 = vunpack.c.l.b16 %v234
        %v395 = vunpack.c.h.b16 %v234
        %v396 = vunpack.c.l.b16 %v235
        %v397 = vunpack.c.h.b16 %v235
        %v398 = vunpack.c.l.b16 %v236
        %v399 = vunpack.c.h.b16 %v236
        %v400 = vunpack.c.l.b16 %v237
        %v401 = vunpack.c.h.b16 %v237
        %v402 = vunpack.c.l.b16 %v238
        %v403 = vunpack.c.h.b16 %v238
        %v404 = vunpack.c.l.b16 %v239
        %v405 = vunpack.c.h.b16 %v239
        %v406 = vunpack.c.l.b16 %v240
        %v407 = vunpack.c.h.b16 %v240
        %v408 = vunpack.c.l.b16 %v241
        %v409 = vunpack.c.h.b16 %v241
        %v410 = vunpack.c.l.b16 %v242
        %v411 = vunpack.c.h.b16 %v242
        %v412 = vunpack.c.l.b16 %v243
        %v413 = vunpack.c.h.b16 %v243
        %v414 = vunpack.c.l.b16 %v244
        %v415 = vunpack.c.h.b16 %v244
        %v416 = vunpack.c.l.b16 %v245
        %v417 = vunpack.c.h.b16 %v245
        %v418 = vunpack.c.l.b16 %v246
        %v419 = vunpack.c.h.b16 %v246
        %v420 = vunpack.c.l.b16 %v247
        %v421 = vunpack.c.h.b16 %v247
        %v422 = vunpack.c.l.b16 %v248
        %v423 = vunpack.c.h.b16 %v248
        %v424 = vunpack.c.l.b16 %v249
        %v425 = vunpack.c.h.b16 %v249
        %v426 = vunpack.c.l.b16 %v250
        %v427 = vunpack.c.h.b16 %v250
        %v428 = vunpack.c.l.b16 %v251
        %v429 = vunpack.c.h.b16 %v251
        %v430 = vunpack.c.l.b16 %v252
        %v431 = vunpack.c.h.b16 %v252
        %v432 = vunpack.c.l.b16 %v253
        %v433 = vunpack.c.h.b16 %v253
        %v434 = vpack.c.b16 %v386, %v370
        %v435 = vpack.c.b16 %v387, %v371
        %v436 = vpack.c.b16 %v388, %v372
        %v437 = vpack.c.b16 %v389, %v373
        %v438 = vpack.c.b16 %v390, %v374
        %v439 = vpack.c.b16 %v391, %v375
        %v440 = vpack.c.b16 %v392, %v376
        %v441 = vpack.c.b16 %v393, %v377
        %v442 = vpack.c.b16 %v394, %v378
        %v443 = vpack.c.b16 %v395, %v379
        %v444 = vpack.c.b16 %v396, %v380
        %v445 = vpack.c.b16 %v397, %v381
        %v446 = vpack.c.b16 %v398, %v382
        %v447 = vpack.c.b16 %v399, %v383
        %v448 = vpack.c.b16 %v400, %v384
        %v449 = vpack.c.b16 %v401, %v385
        %v450 = vpack.c.b16 %v418, %v402
        %v451 = vpack.c.b16 %v419, %v403
        %v452 = vpack.c.b16 %v420, %v404
        %v453 = vpack.c.b16 %v421, %v405
        %v454 = vpack.c.b16 %v422, %v406
        %v455 = vpack.c.b16 %v423, %v407
        %v456 = vpack.c.b16 %v424, %v408
        %v457 = vpack.c.b16 %v425, %v409
        %v458 = vpack.c.b16 %v426, %v410
        %v459 = vpack.c.b16 %v427, %v411
        %v460 = vpack.c.b16 %v428, %v412
        %v461 = vpack.c.b16 %v429, %v413
        %v462 = vpack.c.b16 %v430, %v414
        %v463 = vpack.c.b16 %v431, %v415
        %v464 = vpack.c.b16 %v432, %v416
        %v465 = vpack.c.b16 %v433, %v417
        %vm498 = vcmask 261120
        %v500 = vsel %vm498, %v221, 0
        %502 = vmatprep.subr.bf16.mxu0 0
        %503 = vmatpush1.bf16.msra.mxu0 0
        %504 = vmatprep.subr.bf16.mxu0 0
        %505 = vmatpush1.bf16.msra.mxu0 0
        %506 = vmatprep.subr.bf16.mxu0 0
        %507 = vmatpush1.bf16.msra.mxu0 0
        %508 = vmatprep.subr.bf16.mxu0 0
        %509 = vmatpush1.bf16.msra.mxu0 0
        %510 = vmatprep.subr.bf16.mxu0 0
        %511 = vmatpush1.bf16.msra.mxu0 0
        %512 = vmatprep.subr.bf16.mxu0 0
        %513 = vmatpush1.bf16.msra.mxu0 0
        %514 = vmatprep.subr.bf16.mxu0 %v451
        %515 = vmatpush1.bf16.msra.mxu0 %v450
        %516 = vmatprep.subr.bf16.mxu0 %v435
        %517 = vmatpush1.bf16.msra.mxu0 %v434
        %518 = vmatprep.subr.bf16.mxu0 0
        %519 = vmatpush2.bf16.msra.mxu0 0
        %520 = vmatprep.subr.bf16.mxu0 0
        %521 = vmatpush2.bf16.msra.mxu0 0
        %522 = vmatprep.subr.bf16.mxu0 0
        %523 = vmatpush2.bf16.msra.mxu0 0
        %524 = vmatprep.subr.bf16.mxu0 0
        %525 = vmatpush2.bf16.msra.mxu0 0
        %526 = vmatprep.subr.bf16.mxu0 0
        %527 = vmatpush2.bf16.msra.mxu0 0
        %528 = vmatprep.subr.bf16.mxu0 0
        %529 = vmatpush2.bf16.msra.mxu0 0
        %530 = vmatprep.subr.bf16.mxu0 0
        %531 = vmatpush2.bf16.msra.mxu0 0
        %532 = vmatprep.subr.bf16.mxu0 0
        %533 = vmatpush2.bf16.msra.mxu0 0
        %534 = vmatprep.mubr.bf16.mxu0 0
        %535 = vmatmul.mubr.bf16.gmra.mxu0 %v500
        %v536 = vpop.f32.mrf.mxu0
        %v537 = vadd.f32 %v261, %v536
        %v538 = vpop.f32.mrf.mxu0
        %v539 = vadd.f32 %v265, %v538
        %v540 = vpop.f32.mrf.mxu0
        %v541 = vpop.f32.mrf.mxu0
        %542 = vdwg.mxu0
        %543 = vmatprep.subr.bf16.mxu0 0
        %544 = vmatpush1.bf16.msra.mxu0 0
        %545 = vmatprep.subr.bf16.mxu0 0
        %546 = vmatpush1.bf16.msra.mxu0 0
        %547 = vmatprep.subr.bf16.mxu0 0
        %548 = vmatpush1.bf16.msra.mxu0 0
        %549 = vmatprep.subr.bf16.mxu0 0
        %550 = vmatpush1.bf16.msra.mxu0 0
        %551 = vmatprep.subr.bf16.mxu0 0
        %552 = vmatpush1.bf16.msra.mxu0 0
        %553 = vmatprep.subr.bf16.mxu0 0
        %554 = vmatpush1.bf16.msra.mxu0 0
        %555 = vmatprep.subr.bf16.mxu0 %v453
        %556 = vmatpush1.bf16.msra.mxu0 %v452
        %557 = vmatprep.subr.bf16.mxu0 %v437
        %558 = vmatpush1.bf16.msra.mxu0 %v436
        %559 = vmatprep.subr.bf16.mxu0 0
        %560 = vmatpush2.bf16.msra.mxu0 0
        %561 = vmatprep.subr.bf16.mxu0 0
        %562 = vmatpush2.bf16.msra.mxu0 0
        %563 = vmatprep.subr.bf16.mxu0 0
        %564 = vmatpush2.bf16.msra.mxu0 0
        %565 = vmatprep.subr.bf16.mxu0 0
        %566 = vmatpush2.bf16.msra.mxu0 0
        %567 = vmatprep.subr.bf16.mxu0 0
        %568 = vmatpush2.bf16.msra.mxu0 0
        %569 = vmatprep.subr.bf16.mxu0 0
        %570 = vmatpush2.bf16.msra.mxu0 0
        %571 = vmatprep.subr.bf16.mxu0 0
        %572 = vmatpush2.bf16.msra.mxu0 0
        %573 = vmatprep.subr.bf16.mxu0 0
        %574 = vmatpush2.bf16.msra.mxu0 0
        %575 = vmatprep.mubr.bf16.mxu0 0
        %576 = vmatmul.mubr.bf16.gmra.mxu0 %v500
        %v577 = vpop.f32.mrf.mxu0
        %v578 = vadd.f32 %v269, %v577
        %v579 = vpop.f32.mrf.mxu0
        %v580 = vadd.f32 %v273, %v579
        %v581 = vpop.f32.mrf.mxu0
        %v582 = vpop.f32.mrf.mxu0
        %583 = vdwg.mxu0
        %584 = vmatprep.subr.bf16.mxu0 0
        %585 = vmatpush1.bf16.msra.mxu0 0
        %586 = vmatprep.subr.bf16.mxu0 0
        %587 = vmatpush1.bf16.msra.mxu0 0
        %588 = vmatprep.subr.bf16.mxu0 0
        %589 = vmatpush1.bf16.msra.mxu0 0
        %590 = vmatprep.subr.bf16.mxu0 0
        %591 = vmatpush1.bf16.msra.mxu0 0
        %592 = vmatprep.subr.bf16.mxu0 0
        %593 = vmatpush1.bf16.msra.mxu0 0
        %594 = vmatprep.subr.bf16.mxu0 0
        %595 = vmatpush1.bf16.msra.mxu0 0
        %596 = vmatprep.subr.bf16.mxu0 %v455
        %597 = vmatpush1.bf16.msra.mxu0 %v454
        %598 = vmatprep.subr.bf16.mxu0 %v439
        %599 = vmatpush1.bf16.msra.mxu0 %v438
        %600 = vmatprep.subr.bf16.mxu0 0
        %601 = vmatpush2.bf16.msra.mxu0 0
        %602 = vmatprep.subr.bf16.mxu0 0
        %603 = vmatpush2.bf16.msra.mxu0 0
        %604 = vmatprep.subr.bf16.mxu0 0
        %605 = vmatpush2.bf16.msra.mxu0 0
        %606 = vmatprep.subr.bf16.mxu0 0
        %607 = vmatpush2.bf16.msra.mxu0 0
        %608 = vmatprep.subr.bf16.mxu0 0
        %609 = vmatpush2.bf16.msra.mxu0 0
        %610 = vmatprep.subr.bf16.mxu0 0
        %611 = vmatpush2.bf16.msra.mxu0 0
        %612 = vmatprep.subr.bf16.mxu0 0
        %613 = vmatpush2.bf16.msra.mxu0 0
        %614 = vmatprep.subr.bf16.mxu0 0
        %615 = vmatpush2.bf16.msra.mxu0 0
        %616 = vmatprep.mubr.bf16.mxu0 0
        %617 = vmatmul.mubr.bf16.gmra.mxu0 %v500
        %v618 = vpop.f32.mrf.mxu0
        %v619 = vadd.f32 %v277, %v618
        %v620 = vpop.f32.mrf.mxu0
        %v621 = vadd.f32 %v281, %v620
        %v622 = vpop.f32.mrf.mxu0
        %v623 = vpop.f32.mrf.mxu0
        %624 = vdwg.mxu0
        %625 = vmatprep.subr.bf16.mxu0 0
        %626 = vmatpush1.bf16.msra.mxu0 0
        %627 = vmatprep.subr.bf16.mxu0 0
        %628 = vmatpush1.bf16.msra.mxu0 0
        %629 = vmatprep.subr.bf16.mxu0 0
        %630 = vmatpush1.bf16.msra.mxu0 0
        %631 = vmatprep.subr.bf16.mxu0 0
        %632 = vmatpush1.bf16.msra.mxu0 0
        %633 = vmatprep.subr.bf16.mxu0 0
        %634 = vmatpush1.bf16.msra.mxu0 0
        %635 = vmatprep.subr.bf16.mxu0 0
        %636 = vmatpush1.bf16.msra.mxu0 0
        %637 = vmatprep.subr.bf16.mxu0 %v457
        %638 = vmatpush1.bf16.msra.mxu0 %v456
        %639 = vmatprep.subr.bf16.mxu0 %v441
        %640 = vmatpush1.bf16.msra.mxu0 %v440
        %641 = vmatprep.subr.bf16.mxu0 0
        %642 = vmatpush2.bf16.msra.mxu0 0
        %643 = vmatprep.subr.bf16.mxu0 0
        %644 = vmatpush2.bf16.msra.mxu0 0
        %645 = vmatprep.subr.bf16.mxu0 0
        %646 = vmatpush2.bf16.msra.mxu0 0
        %647 = vmatprep.subr.bf16.mxu0 0
        %648 = vmatpush2.bf16.msra.mxu0 0
        %649 = vmatprep.subr.bf16.mxu0 0
        %650 = vmatpush2.bf16.msra.mxu0 0
        %651 = vmatprep.subr.bf16.mxu0 0
        %652 = vmatpush2.bf16.msra.mxu0 0
        %653 = vmatprep.subr.bf16.mxu0 0
        %654 = vmatpush2.bf16.msra.mxu0 0
        %655 = vmatprep.subr.bf16.mxu0 0
        %656 = vmatpush2.bf16.msra.mxu0 0
        %657 = vmatprep.mubr.bf16.mxu0 0
        %658 = vmatmul.mubr.bf16.gmra.mxu0 %v500
        %v659 = vpop.f32.mrf.mxu0
        %v660 = vadd.f32 %v285, %v659
        %v661 = vpop.f32.mrf.mxu0
        %v662 = vadd.f32 %v289, %v661
        %v663 = vpop.f32.mrf.mxu0
        %v664 = vpop.f32.mrf.mxu0
        %665 = vdwg.mxu0
        %666 = vmatprep.subr.bf16.mxu0 0
        %667 = vmatpush1.bf16.msra.mxu0 0
        %668 = vmatprep.subr.bf16.mxu0 0
        %669 = vmatpush1.bf16.msra.mxu0 0
        %670 = vmatprep.subr.bf16.mxu0 0
        %671 = vmatpush1.bf16.msra.mxu0 0
        %672 = vmatprep.subr.bf16.mxu0 0
        %673 = vmatpush1.bf16.msra.mxu0 0
        %674 = vmatprep.subr.bf16.mxu0 0
        %675 = vmatpush1.bf16.msra.mxu0 0
        %676 = vmatprep.subr.bf16.mxu0 0
        %677 = vmatpush1.bf16.msra.mxu0 0
        %678 = vmatprep.subr.bf16.mxu0 %v459
        %679 = vmatpush1.bf16.msra.mxu0 %v458
        %680 = vmatprep.subr.bf16.mxu0 %v443
        %681 = vmatpush1.bf16.msra.mxu0 %v442
        %682 = vmatprep.subr.bf16.mxu0 0
        %683 = vmatpush2.bf16.msra.mxu0 0
        %684 = vmatprep.subr.bf16.mxu0 0
        %685 = vmatpush2.bf16.msra.mxu0 0
        %686 = vmatprep.subr.bf16.mxu0 0
        %687 = vmatpush2.bf16.msra.mxu0 0
        %688 = vmatprep.subr.bf16.mxu0 0
        %689 = vmatpush2.bf16.msra.mxu0 0
        %690 = vmatprep.subr.bf16.mxu0 0
        %691 = vmatpush2.bf16.msra.mxu0 0
        %692 = vmatprep.subr.bf16.mxu0 0
        %693 = vmatpush2.bf16.msra.mxu0 0
        %694 = vmatprep.subr.bf16.mxu0 0
        %695 = vmatpush2.bf16.msra.mxu0 0
        %696 = vmatprep.subr.bf16.mxu0 0
        %697 = vmatpush2.bf16.msra.mxu0 0
        %698 = vmatprep.mubr.bf16.mxu0 0
        %699 = vmatmul.mubr.bf16.gmra.mxu0 %v500
        %v700 = vpop.f32.mrf.mxu0
        %v701 = vadd.f32 %v293, %v700
        %v702 = vpop.f32.mrf.mxu0
        %v703 = vadd.f32 %v297, %v702
        %v704 = vpop.f32.mrf.mxu0
        %v705 = vpop.f32.mrf.mxu0
        %706 = vdwg.mxu0
        %707 = vmatprep.subr.bf16.mxu0 0
        %708 = vmatpush1.bf16.msra.mxu0 0
        %709 = vmatprep.subr.bf16.mxu0 0
        %710 = vmatpush1.bf16.msra.mxu0 0
        %711 = vmatprep.subr.bf16.mxu0 0
        %712 = vmatpush1.bf16.msra.mxu0 0
        %713 = vmatprep.subr.bf16.mxu0 0
        %714 = vmatpush1.bf16.msra.mxu0 0
        %715 = vmatprep.subr.bf16.mxu0 0
        %716 = vmatpush1.bf16.msra.mxu0 0
        %717 = vmatprep.subr.bf16.mxu0 0
        %718 = vmatpush1.bf16.msra.mxu0 0
        %719 = vmatprep.subr.bf16.mxu0 %v461
        %720 = vmatpush1.bf16.msra.mxu0 %v460
        %721 = vmatprep.subr.bf16.mxu0 %v445
        %722 = vmatpush1.bf16.msra.mxu0 %v444
        %723 = vmatprep.subr.bf16.mxu0 0
        %724 = vmatpush2.bf16.msra.mxu0 0
        %725 = vmatprep.subr.bf16.mxu0 0
        %726 = vmatpush2.bf16.msra.mxu0 0
        %727 = vmatprep.subr.bf16.mxu0 0
        %728 = vmatpush2.bf16.msra.mxu0 0
        %729 = vmatprep.subr.bf16.mxu0 0
        %730 = vmatpush2.bf16.msra.mxu0 0
        %731 = vmatprep.subr.bf16.mxu0 0
        %732 = vmatpush2.bf16.msra.mxu0 0
        %733 = vmatprep.subr.bf16.mxu0 0
        %734 = vmatpush2.bf16.msra.mxu0 0
        %735 = vmatprep.subr.bf16.mxu0 0
        %736 = vmatpush2.bf16.msra.mxu0 0
        %737 = vmatprep.subr.bf16.mxu0 0
        %738 = vmatpush2.bf16.msra.mxu0 0
        %739 = vmatprep.mubr.bf16.mxu0 0
        %740 = vmatmul.mubr.bf16.gmra.mxu0 %v500
        %v741 = vpop.f32.mrf.mxu0
        %v742 = vadd.f32 %v301, %v741
        %v743 = vpop.f32.mrf.mxu0
        %v744 = vadd.f32 %v305, %v743
        %v745 = vpop.f32.mrf.mxu0
        %v746 = vpop.f32.mrf.mxu0
        %747 = vdwg.mxu0
        %748 = vmatprep.subr.bf16.mxu0 0
        %749 = vmatpush1.bf16.msra.mxu0 0
        %750 = vmatprep.subr.bf16.mxu0 0
        %751 = vmatpush1.bf16.msra.mxu0 0
        %752 = vmatprep.subr.bf16.mxu0 0
        %753 = vmatpush1.bf16.msra.mxu0 0
        %754 = vmatprep.subr.bf16.mxu0 0
        %755 = vmatpush1.bf16.msra.mxu0 0
        %756 = vmatprep.subr.bf16.mxu0 0
        %757 = vmatpush1.bf16.msra.mxu0 0
        %758 = vmatprep.subr.bf16.mxu0 0
        %759 = vmatpush1.bf16.msra.mxu0 0
        %760 = vmatprep.subr.bf16.mxu0 %v463
        %761 = vmatpush1.bf16.msra.mxu0 %v462
        %762 = vmatprep.subr.bf16.mxu0 %v447
        %763 = vmatpush1.bf16.msra.mxu0 %v446
        %764 = vmatprep.subr.bf16.mxu0 0
        %765 = vmatpush2.bf16.msra.mxu0 0
        %766 = vmatprep.subr.bf16.mxu0 0
        %767 = vmatpush2.bf16.msra.mxu0 0
        %768 = vmatprep.subr.bf16.mxu0 0
        %769 = vmatpush2.bf16.msra.mxu0 0
        %770 = vmatprep.subr.bf16.mxu0 0
        %771 = vmatpush2.bf16.msra.mxu0 0
        %772 = vmatprep.subr.bf16.mxu0 0
        %773 = vmatpush2.bf16.msra.mxu0 0
        %774 = vmatprep.subr.bf16.mxu0 0
        %775 = vmatpush2.bf16.msra.mxu0 0
        %776 = vmatprep.subr.bf16.mxu0 0
        %777 = vmatpush2.bf16.msra.mxu0 0
        %778 = vmatprep.subr.bf16.mxu0 0
        %779 = vmatpush2.bf16.msra.mxu0 0
        %780 = vmatprep.mubr.bf16.mxu0 0
        %781 = vmatmul.mubr.bf16.gmra.mxu0 %v500
        %v782 = vpop.f32.mrf.mxu0
        %v783 = vadd.f32 %v309, %v782
        %v784 = vpop.f32.mrf.mxu0
        %v785 = vadd.f32 %v313, %v784
        %v786 = vpop.f32.mrf.mxu0
        %v787 = vpop.f32.mrf.mxu0
        %788 = vdwg.mxu0
        %789 = vmatprep.subr.bf16.mxu0 0
        %790 = vmatpush1.bf16.msra.mxu0 0
        %791 = vmatprep.subr.bf16.mxu0 0
        %792 = vmatpush1.bf16.msra.mxu0 0
        %793 = vmatprep.subr.bf16.mxu0 0
        %794 = vmatpush1.bf16.msra.mxu0 0
        %795 = vmatprep.subr.bf16.mxu0 0
        %796 = vmatpush1.bf16.msra.mxu0 0
        %797 = vmatprep.subr.bf16.mxu0 0
        %798 = vmatpush1.bf16.msra.mxu0 0
        %799 = vmatprep.subr.bf16.mxu0 0
        %800 = vmatpush1.bf16.msra.mxu0 0
        %801 = vmatprep.subr.bf16.mxu0 %v465
        %802 = vmatpush1.bf16.msra.mxu0 %v464
        %803 = vmatprep.subr.bf16.mxu0 %v449
        %804 = vmatpush1.bf16.msra.mxu0 %v448
        %805 = vmatprep.subr.bf16.mxu0 0
        %806 = vmatpush2.bf16.msra.mxu0 0
        %807 = vmatprep.subr.bf16.mxu0 0
        %808 = vmatpush2.bf16.msra.mxu0 0
        %809 = vmatprep.subr.bf16.mxu0 0
        %810 = vmatpush2.bf16.msra.mxu0 0
        %811 = vmatprep.subr.bf16.mxu0 0
        %812 = vmatpush2.bf16.msra.mxu0 0
        %813 = vmatprep.subr.bf16.mxu0 0
        %814 = vmatpush2.bf16.msra.mxu0 0
        %815 = vmatprep.subr.bf16.mxu0 0
        %816 = vmatpush2.bf16.msra.mxu0 0
        %817 = vmatprep.subr.bf16.mxu0 0
        %818 = vmatpush2.bf16.msra.mxu0 0
        %819 = vmatprep.subr.bf16.mxu0 0
        %820 = vmatpush2.bf16.msra.mxu0 0
        %821 = vmatprep.mubr.bf16.mxu0 0
        %822 = vmatmul.mubr.bf16.gmra.mxu0 %v500
        %v823 = vpop.f32.mrf.mxu0
        %v824 = vadd.f32 %v317, %v823
        %v825 = vpop.f32.mrf.mxu0
        %v826 = vadd.f32 %v321, %v825
        %v827 = vpop.f32.mrf.mxu0
        %v828 = vpop.f32.mrf.mxu0
        %829 = vdwg.mxu0
        %v830 = vmax.f32 %v537, 0.0
        %v831 = vmax.f32 %v539, 0.0
        %v832 = vmax.f32 %v578, 0.0
        %v833 = vmax.f32 %v580, 0.0
        %v834 = vmax.f32 %v619, 0.0
        %v835 = vmax.f32 %v621, 0.0
        %v836 = vmax.f32 %v660, 0.0
        %v837 = vmax.f32 %v662, 0.0
        %v838 = vmax.f32 %v701, 0.0
        %v839 = vmax.f32 %v703, 0.0
        %v840 = vmax.f32 %v742, 0.0
        %v841 = vmax.f32 %v744, 0.0
        %v842 = vmax.f32 %v783, 0.0
        %v843 = vmax.f32 %v785, 0.0
        %v844 = vmax.f32 %v824, 0.0
        %v845 = vmax.f32 %v826, 0.0
        %v846 = vpack.c.bf16 %v830, %v830
        %v847 = vpack.c.bf16 %v831, %v831
        %v848 = vpack.c.bf16 %v832, %v832
        %v849 = vpack.c.bf16 %v833, %v833
        %v850 = vpack.c.bf16 %v834, %v834
        %v851 = vpack.c.bf16 %v835, %v835
        %v852 = vpack.c.bf16 %v836, %v836
        %v853 = vpack.c.bf16 %v837, %v837
        %v854 = vpack.c.bf16 %v838, %v838
        %v855 = vpack.c.bf16 %v839, %v839
        %v856 = vpack.c.bf16 %v840, %v840
        %v857 = vpack.c.bf16 %v841, %v841
        %v858 = vpack.c.bf16 %v842, %v842
        %v859 = vpack.c.bf16 %v843, %v843
        %v860 = vpack.c.bf16 %v844, %v844
        %v861 = vpack.c.bf16 %v845, %v845
        %v862 = vld [vmem:[%s3] sm:$0xf]
        %v863 = vld [vmem:[%s3 + $0x4] sm:$0xf]
        %v864 = vld [vmem:[%s3 + $0x8] sm:$0xf]
        %v865 = vld [vmem:[%s3 + $0xc] sm:$0xf]
        %v866 = vld [vmem:[%s3 + $0x10] sm:$0xf]
        %v867 = vld [vmem:[%s3 + $0x14] sm:$0xf]
        %v868 = vld [vmem:[%s3 + $0x18] sm:$0xf]
        %v869 = vld [vmem:[%s3 + $0x1c] sm:$0xf]
        %v870 = vld [vmem:[%s3 + $0x20] sm:$0xf]
        %v871 = vld [vmem:[%s3 + $0x24] sm:$0xf]
        %v872 = vld [vmem:[%s3 + $0x28] sm:$0xf]
        %v873 = vld [vmem:[%s3 + $0x2c] sm:$0xf]
        %v874 = vld [vmem:[%s3 + $0x30] sm:$0xf]
        %v875 = vld [vmem:[%s3 + $0x34] sm:$0xf]
        %v876 = vld [vmem:[%s3 + $0x38] sm:$0xf]
        %v877 = vld [vmem:[%s3 + $0x3c] sm:$0xf]
        %v878 = vld [vmem:[%s3 + $0x40] sm:$0xf]
        %v879 = vld [vmem:[%s3 + $0x44] sm:$0xf]
        %v880 = vld [vmem:[%s3 + $0x48] sm:$0xf]
        %v881 = vld [vmem:[%s3 + $0x4c] sm:$0xf]
        %v882 = vld [vmem:[%s3 + $0x50] sm:$0xf]
        %v883 = vld [vmem:[%s3 + $0x54] sm:$0xf]
        %v884 = vld [vmem:[%s3 + $0x58] sm:$0xf]
        %v885 = vld [vmem:[%s3 + $0x5c] sm:$0xf]
        %v886 = vld [vmem:[%s3 + $0x60] sm:$0xf]
        %v887 = vld [vmem:[%s3 + $0x64] sm:$0xf]
        %v888 = vld [vmem:[%s3 + $0x68] sm:$0xf]
        %v889 = vld [vmem:[%s3 + $0x6c] sm:$0xf]
        %v890 = vld [vmem:[%s3 + $0x70] sm:$0xf]
        %v891 = vld [vmem:[%s3 + $0x74] sm:$0xf]
        %v892 = vld [vmem:[%s3 + $0x78] sm:$0xf]
        %v893 = vld [vmem:[%s3 + $0x7c] sm:$0xf]
        %v894 = vld [vmem:[%s3 + $0x80] sm:$0xf]
        %v895 = vld [vmem:[%s3 + $0x84] sm:$0xf]
        %v896 = vld [vmem:[%s3 + $0x88] sm:$0xf]
        %v897 = vld [vmem:[%s3 + $0x8c] sm:$0xf]
        %v898 = vld [vmem:[%s3 + $0x90] sm:$0xf]
        %v899 = vld [vmem:[%s3 + $0x94] sm:$0xf]
        %v900 = vld [vmem:[%s3 + $0x98] sm:$0xf]
        %v901 = vld [vmem:[%s3 + $0x9c] sm:$0xf]
        %v902 = vld [vmem:[%s3 + $0xa0] sm:$0xf]
        %v903 = vld [vmem:[%s3 + $0xa4] sm:$0xf]
        %v904 = vld [vmem:[%s3 + $0xa8] sm:$0xf]
        %v905 = vld [vmem:[%s3 + $0xac] sm:$0xf]
        %v906 = vld [vmem:[%s3 + $0xb0] sm:$0xf]
        %v907 = vld [vmem:[%s3 + $0xb4] sm:$0xf]
        %v908 = vld [vmem:[%s3 + $0xb8] sm:$0xf]
        %v909 = vld [vmem:[%s3 + $0xbc] sm:$0xf]
        %v910 = vld [vmem:[%s3 + $0xc0] sm:$0xf]
        %v911 = vld [vmem:[%s3 + $0xc4] sm:$0xf]
        %v912 = vld [vmem:[%s3 + $0xc8] sm:$0xf]
        %v913 = vld [vmem:[%s3 + $0xcc] sm:$0xf]
        %v914 = vld [vmem:[%s3 + $0xd0] sm:$0xf]
        %v915 = vld [vmem:[%s3 + $0xd4] sm:$0xf]
        %v916 = vld [vmem:[%s3 + $0xd8] sm:$0xf]
        %v917 = vld [vmem:[%s3 + $0xdc] sm:$0xf]
        %v918 = vld [vmem:[%s3 + $0xe0] sm:$0xf]
        %v919 = vld [vmem:[%s3 + $0xe4] sm:$0xf]
        %v920 = vld [vmem:[%s3 + $0xe8] sm:$0xf]
        %v921 = vld [vmem:[%s3 + $0xec] sm:$0xf]
        %v922 = vld [vmem:[%s3 + $0xf0] sm:$0xf]
        %v923 = vld [vmem:[%s3 + $0xf4] sm:$0xf]
        %v924 = vld [vmem:[%s3 + $0xf8] sm:$0xf]
        %v925 = vld [vmem:[%s3 + $0xfc] sm:$0xf]
        %v926 = vld [vmem:[%s3 + $0x100] sm:$0xf]
        %v927 = vld [vmem:[%s3 + $0x104] sm:$0xf]
        %v928 = vld [vmem:[%s3 + $0x108] sm:$0xf]
        %v929 = vld [vmem:[%s3 + $0x10c] sm:$0xf]
        %v930 = vld [vmem:[%s3 + $0x110] sm:$0xf]
        %v931 = vld [vmem:[%s3 + $0x114] sm:$0xf]
        %v932 = vld [vmem:[%s3 + $0x118] sm:$0xf]
        %v933 = vld [vmem:[%s3 + $0x11c] sm:$0xf]
        %v934 = vld [vmem:[%s3 + $0x120] sm:$0xf]
        %v935 = vld [vmem:[%s3 + $0x124] sm:$0xf]
        %v936 = vld [vmem:[%s3 + $0x128] sm:$0xf]
        %v937 = vld [vmem:[%s3 + $0x12c] sm:$0xf]
        %v938 = vld [vmem:[%s3 + $0x130] sm:$0xf]
        %v939 = vld [vmem:[%s3 + $0x134] sm:$0xf]
        %v940 = vld [vmem:[%s3 + $0x138] sm:$0xf]
        %v941 = vld [vmem:[%s3 + $0x13c] sm:$0xf]
        %v942 = vld [vmem:[%s3 + $0x140] sm:$0xf]
        %v943 = vld [vmem:[%s3 + $0x144] sm:$0xf]
        %v944 = vld [vmem:[%s3 + $0x148] sm:$0xf]
        %v945 = vld [vmem:[%s3 + $0x14c] sm:$0xf]
        %v946 = vld [vmem:[%s3 + $0x150] sm:$0xf]
        %v947 = vld [vmem:[%s3 + $0x154] sm:$0xf]
        %v948 = vld [vmem:[%s3 + $0x158] sm:$0xf]
        %v949 = vld [vmem:[%s3 + $0x15c] sm:$0xf]
        %v950 = vld [vmem:[%s3 + $0x160] sm:$0xf]
        %v951 = vld [vmem:[%s3 + $0x164] sm:$0xf]
        %v952 = vld [vmem:[%s3 + $0x168] sm:$0xf]
        %v953 = vld [vmem:[%s3 + $0x16c] sm:$0xf]
        %v954 = vld [vmem:[%s3 + $0x170] sm:$0xf]
        %v955 = vld [vmem:[%s3 + $0x174] sm:$0xf]
        %v956 = vld [vmem:[%s3 + $0x178] sm:$0xf]
        %v957 = vld [vmem:[%s3 + $0x17c] sm:$0xf]
        %v958 = vld [vmem:[%s3 + $0x180] sm:$0xf]
        %v959 = vld [vmem:[%s3 + $0x184] sm:$0xf]
        %v960 = vld [vmem:[%s3 + $0x188] sm:$0xf]
        %v961 = vld [vmem:[%s3 + $0x18c] sm:$0xf]
        %v962 = vld [vmem:[%s3 + $0x190] sm:$0xf]
        %v963 = vld [vmem:[%s3 + $0x194] sm:$0xf]
        %v964 = vld [vmem:[%s3 + $0x198] sm:$0xf]
        %v965 = vld [vmem:[%s3 + $0x19c] sm:$0xf]
        %v966 = vld [vmem:[%s3 + $0x1a0] sm:$0xf]
        %v967 = vld [vmem:[%s3 + $0x1a4] sm:$0xf]
        %v968 = vld [vmem:[%s3 + $0x1a8] sm:$0xf]
        %v969 = vld [vmem:[%s3 + $0x1ac] sm:$0xf]
        %v970 = vld [vmem:[%s3 + $0x1b0] sm:$0xf]
        %v971 = vld [vmem:[%s3 + $0x1b4] sm:$0xf]
        %v972 = vld [vmem:[%s3 + $0x1b8] sm:$0xf]
        %v973 = vld [vmem:[%s3 + $0x1bc] sm:$0xf]
        %v974 = vld [vmem:[%s3 + $0x1c0] sm:$0xf]
        %v975 = vld [vmem:[%s3 + $0x1c4] sm:$0xf]
        %v976 = vld [vmem:[%s3 + $0x1c8] sm:$0xf]
        %v977 = vld [vmem:[%s3 + $0x1cc] sm:$0xf]
        %v978 = vld [vmem:[%s3 + $0x1d0] sm:$0xf]
        %v979 = vld [vmem:[%s3 + $0x1d4] sm:$0xf]
        %v980 = vld [vmem:[%s3 + $0x1d8] sm:$0xf]
        %v981 = vld [vmem:[%s3 + $0x1dc] sm:$0xf]
        %v982 = vld [vmem:[%s3 + $0x1e0] sm:$0xf]
        %v983 = vld [vmem:[%s3 + $0x1e4] sm:$0xf]
        %v984 = vld [vmem:[%s3 + $0x1e8] sm:$0xf]
        %v985 = vld [vmem:[%s3 + $0x1ec] sm:$0xf]
        %v986 = vld [vmem:[%s3 + $0x1f0] sm:$0xf]
        %v987 = vld [vmem:[%s3 + $0x1f4] sm:$0xf]
        %v988 = vld [vmem:[%s3 + $0x1f8] sm:$0xf]
        %v989 = vld [vmem:[%s3 + $0x1fc] sm:$0xf]
        %v990 = vld [vmem:[%s3 + $0x200] sm:$0xf]
        %v991 = vld [vmem:[%s3 + $0x204] sm:$0xf]
        %v992 = vld [vmem:[%s3 + $0x208] sm:$0xf]
        %v993 = vld [vmem:[%s3 + $0x20c] sm:$0xf]
        %v994 = vld [vmem:[%s3 + $0x210] sm:$0xf]
        %v995 = vld [vmem:[%s3 + $0x214] sm:$0xf]
        %v996 = vld [vmem:[%s3 + $0x218] sm:$0xf]
        %v997 = vld [vmem:[%s3 + $0x21c] sm:$0xf]
        %v998 = vld [vmem:[%s3 + $0x220] sm:$0xf]
        %v999 = vld [vmem:[%s3 + $0x224] sm:$0xf]
        %v1000 = vld [vmem:[%s3 + $0x228] sm:$0xf]
        %v1001 = vld [vmem:[%s3 + $0x22c] sm:$0xf]
        %v1002 = vld [vmem:[%s3 + $0x230] sm:$0xf]
        %v1003 = vld [vmem:[%s3 + $0x234] sm:$0xf]
        %v1004 = vld [vmem:[%s3 + $0x238] sm:$0xf]
        %v1005 = vld [vmem:[%s3 + $0x23c] sm:$0xf]
        %v1006 = vld [vmem:[%s3 + $0x240] sm:$0xf]
        %v1007 = vld [vmem:[%s3 + $0x244] sm:$0xf]
        %v1008 = vld [vmem:[%s3 + $0x248] sm:$0xf]
        %v1009 = vld [vmem:[%s3 + $0x24c] sm:$0xf]
        %v1010 = vld [vmem:[%s3 + $0x250] sm:$0xf]
        %v1011 = vld [vmem:[%s3 + $0x254] sm:$0xf]
        %v1012 = vld [vmem:[%s3 + $0x258] sm:$0xf]
        %v1013 = vld [vmem:[%s3 + $0x25c] sm:$0xf]
        %v1014 = vld [vmem:[%s3 + $0x260] sm:$0xf]
        %v1015 = vld [vmem:[%s3 + $0x264] sm:$0xf]
        %v1016 = vld [vmem:[%s3 + $0x268] sm:$0xf]
        %v1017 = vld [vmem:[%s3 + $0x26c] sm:$0xf]
        %v1018 = vld [vmem:[%s3 + $0x270] sm:$0xf]
        %v1019 = vld [vmem:[%s3 + $0x274] sm:$0xf]
        %v1020 = vld [vmem:[%s3 + $0x278] sm:$0xf]
        %v1021 = vld [vmem:[%s3 + $0x27c] sm:$0xf]
        %v1022 = vld [vmem:[%s3 + $0x280] sm:$0xf]
        %v1023 = vld [vmem:[%s3 + $0x284] sm:$0xf]
        %v1024 = vld [vmem:[%s3 + $0x288] sm:$0xf]
        %v1025 = vld [vmem:[%s3 + $0x28c] sm:$0xf]
        %v1026 = vld [vmem:[%s3 + $0x290] sm:$0xf]
        %v1027 = vld [vmem:[%s3 + $0x294] sm:$0xf]
        %v1028 = vld [vmem:[%s3 + $0x298] sm:$0xf]
        %v1029 = vld [vmem:[%s3 + $0x29c] sm:$0xf]
        %v1030 = vld [vmem:[%s3 + $0x2a0] sm:$0xf]
        %v1031 = vld [vmem:[%s3 + $0x2a4] sm:$0xf]
        %v1032 = vld [vmem:[%s3 + $0x2a8] sm:$0xf]
        %v1033 = vld [vmem:[%s3 + $0x2ac] sm:$0xf]
        %v1034 = vld [vmem:[%s3 + $0x2b0] sm:$0xf]
        %v1035 = vld [vmem:[%s3 + $0x2b4] sm:$0xf]
        %v1036 = vld [vmem:[%s3 + $0x2b8] sm:$0xf]
        %v1037 = vld [vmem:[%s3 + $0x2bc] sm:$0xf]
        %v1038 = vld [vmem:[%s3 + $0x2c0] sm:$0xf]
        %v1039 = vld [vmem:[%s3 + $0x2c4] sm:$0xf]
        %v1040 = vld [vmem:[%s3 + $0x2c8] sm:$0xf]
        %v1041 = vld [vmem:[%s3 + $0x2cc] sm:$0xf]
        %v1042 = vld [vmem:[%s3 + $0x2d0] sm:$0xf]
        %v1043 = vld [vmem:[%s3 + $0x2d4] sm:$0xf]
        %v1044 = vld [vmem:[%s3 + $0x2d8] sm:$0xf]
        %v1045 = vld [vmem:[%s3 + $0x2dc] sm:$0xf]
        %v1046 = vld [vmem:[%s3 + $0x2e0] sm:$0xf]
        %v1047 = vld [vmem:[%s3 + $0x2e4] sm:$0xf]
        %v1048 = vld [vmem:[%s3 + $0x2e8] sm:$0xf]
        %v1049 = vld [vmem:[%s3 + $0x2ec] sm:$0xf]
        %v1050 = vld [vmem:[%s3 + $0x2f0] sm:$0xf]
        %v1051 = vld [vmem:[%s3 + $0x2f4] sm:$0xf]
        %v1052 = vld [vmem:[%s3 + $0x2f8] sm:$0xf]
        %v1053 = vld [vmem:[%s3 + $0x2fc] sm:$0xf]
        %v1054 = vld [vmem:[%s3 + $0x300] sm:$0xf]
        %v1055 = vld [vmem:[%s3 + $0x304] sm:$0xf]
        %v1056 = vld [vmem:[%s3 + $0x308] sm:$0xf]
        %v1057 = vld [vmem:[%s3 + $0x30c] sm:$0xf]
        %v1058 = vld [vmem:[%s3 + $0x310] sm:$0xf]
        %v1059 = vld [vmem:[%s3 + $0x314] sm:$0xf]
        %v1060 = vld [vmem:[%s3 + $0x318] sm:$0xf]
        %v1061 = vld [vmem:[%s3 + $0x31c] sm:$0xf]
        %v1062 = vld [vmem:[%s3 + $0x320] sm:$0xf]
        %v1063 = vld [vmem:[%s3 + $0x324] sm:$0xf]
        %v1064 = vld [vmem:[%s3 + $0x328] sm:$0xf]
        %v1065 = vld [vmem:[%s3 + $0x32c] sm:$0xf]
        %v1066 = vld [vmem:[%s3 + $0x330] sm:$0xf]
        %v1067 = vld [vmem:[%s3 + $0x334] sm:$0xf]
        %v1068 = vld [vmem:[%s3 + $0x338] sm:$0xf]
        %v1069 = vld [vmem:[%s3 + $0x33c] sm:$0xf]
        %v1070 = vld [vmem:[%s3 + $0x340] sm:$0xf]
        %v1071 = vld [vmem:[%s3 + $0x344] sm:$0xf]
        %v1072 = vld [vmem:[%s3 + $0x348] sm:$0xf]
        %v1073 = vld [vmem:[%s3 + $0x34c] sm:$0xf]
        %v1074 = vld [vmem:[%s3 + $0x350] sm:$0xf]
        %v1075 = vld [vmem:[%s3 + $0x354] sm:$0xf]
        %v1076 = vld [vmem:[%s3 + $0x358] sm:$0xf]
        %v1077 = vld [vmem:[%s3 + $0x35c] sm:$0xf]
        %v1078 = vld [vmem:[%s3 + $0x360] sm:$0xf]
        %v1079 = vld [vmem:[%s3 + $0x364] sm:$0xf]
        %v1080 = vld [vmem:[%s3 + $0x368] sm:$0xf]
        %v1081 = vld [vmem:[%s3 + $0x36c] sm:$0xf]
        %v1082 = vld [vmem:[%s3 + $0x370] sm:$0xf]
        %v1083 = vld [vmem:[%s3 + $0x374] sm:$0xf]
        %v1084 = vld [vmem:[%s3 + $0x378] sm:$0xf]
        %v1085 = vld [vmem:[%s3 + $0x37c] sm:$0xf]
        %v1086 = vld [vmem:[%s3 + $0x380] sm:$0xf]
        %v1087 = vld [vmem:[%s3 + $0x384] sm:$0xf]
        %v1088 = vld [vmem:[%s3 + $0x388] sm:$0xf]
        %v1089 = vld [vmem:[%s3 + $0x38c] sm:$0xf]
        %v1090 = vld [vmem:[%s3 + $0x390] sm:$0xf]
        %v1091 = vld [vmem:[%s3 + $0x394] sm:$0xf]
        %v1092 = vld [vmem:[%s3 + $0x398] sm:$0xf]
        %v1093 = vld [vmem:[%s3 + $0x39c] sm:$0xf]
        %v1094 = vld [vmem:[%s3 + $0x3a0] sm:$0xf]
        %v1095 = vld [vmem:[%s3 + $0x3a4] sm:$0xf]
        %v1096 = vld [vmem:[%s3 + $0x3a8] sm:$0xf]
        %v1097 = vld [vmem:[%s3 + $0x3ac] sm:$0xf]
        %v1098 = vld [vmem:[%s3 + $0x3b0] sm:$0xf]
        %v1099 = vld [vmem:[%s3 + $0x3b4] sm:$0xf]
        %v1100 = vld [vmem:[%s3 + $0x3b8] sm:$0xf]
        %v1101 = vld [vmem:[%s3 + $0x3bc] sm:$0xf]
        %v1102 = vld [vmem:[%s3 + $0x3c0] sm:$0xf]
        %v1103 = vld [vmem:[%s3 + $0x3c4] sm:$0xf]
        %v1104 = vld [vmem:[%s3 + $0x3c8] sm:$0xf]
        %v1105 = vld [vmem:[%s3 + $0x3cc] sm:$0xf]
        %v1106 = vld [vmem:[%s3 + $0x3d0] sm:$0xf]
        %v1107 = vld [vmem:[%s3 + $0x3d4] sm:$0xf]
        %v1108 = vld [vmem:[%s3 + $0x3d8] sm:$0xf]
        %v1109 = vld [vmem:[%s3 + $0x3dc] sm:$0xf]
        %v1110 = vld [vmem:[%s3 + $0x3e0] sm:$0xf]
        %v1111 = vld [vmem:[%s3 + $0x3e4] sm:$0xf]
        %v1112 = vld [vmem:[%s3 + $0x3e8] sm:$0xf]
        %v1113 = vld [vmem:[%s3 + $0x3ec] sm:$0xf]
        %v1114 = vld [vmem:[%s3 + $0x3f0] sm:$0xf]
        %v1115 = vld [vmem:[%s3 + $0x3f4] sm:$0xf]
        %v1116 = vld [vmem:[%s3 + $0x3f8] sm:$0xf]
        %v1117 = vld [vmem:[%s3 + $0x3fc] sm:$0xf]
        %v1118 = vld [vmem:[%s4] sm:$0x1]
        %v1120 = vlaneseq
        %v1121 = vshrl.u32 %v1120, 7
        %v1122 = vsub.s32 0, %v1121
        %v1123 = vrot.slane %v1118, %v1122
        %v1381 = vunpack.c.l.b16 %v862
        %v1382 = vunpack.c.l.b16 %v863
        %v1383 = vunpack.c.l.b16 %v864
        %v1384 = vunpack.c.l.b16 %v865
        %v1385 = vunpack.c.l.b16 %v866
        %v1386 = vunpack.c.l.b16 %v867
        %v1387 = vunpack.c.l.b16 %v868
        %v1388 = vunpack.c.l.b16 %v869
        %v1389 = vunpack.c.l.b16 %v870
        %v1390 = vunpack.c.l.b16 %v871
        %v1391 = vunpack.c.l.b16 %v872
        %v1392 = vunpack.c.l.b16 %v873
        %v1393 = vunpack.c.l.b16 %v874
        %v1394 = vunpack.c.l.b16 %v875
        %v1395 = vunpack.c.l.b16 %v876
        %v1396 = vunpack.c.l.b16 %v877
        %v1397 = vunpack.c.l.b16 %v878
        %v1398 = vunpack.c.l.b16 %v879
        %v1399 = vunpack.c.l.b16 %v880
        %v1400 = vunpack.c.l.b16 %v881
        %v1401 = vunpack.c.l.b16 %v882
        %v1402 = vunpack.c.l.b16 %v883
        %v1403 = vunpack.c.l.b16 %v884
        %v1404 = vunpack.c.l.b16 %v885
        %v1405 = vunpack.c.l.b16 %v886
        %v1406 = vunpack.c.l.b16 %v887
        %v1407 = vunpack.c.l.b16 %v888
        %v1408 = vunpack.c.l.b16 %v889
        %v1409 = vunpack.c.l.b16 %v890
        %v1410 = vunpack.c.l.b16 %v891
        %v1411 = vunpack.c.l.b16 %v892
        %v1412 = vunpack.c.l.b16 %v893
        %v1413 = vunpack.c.l.b16 %v894
        %v1414 = vunpack.c.l.b16 %v895
        %v1415 = vunpack.c.l.b16 %v896
        %v1416 = vunpack.c.l.b16 %v897
        %v1417 = vunpack.c.l.b16 %v898
        %v1418 = vunpack.c.l.b16 %v899
        %v1419 = vunpack.c.l.b16 %v900
        %v1420 = vunpack.c.l.b16 %v901
        %v1421 = vunpack.c.l.b16 %v902
        %v1422 = vunpack.c.l.b16 %v903
        %v1423 = vunpack.c.l.b16 %v904
        %v1424 = vunpack.c.l.b16 %v905
        %v1425 = vunpack.c.l.b16 %v906
        %v1426 = vunpack.c.l.b16 %v907
        %v1427 = vunpack.c.l.b16 %v908
        %v1428 = vunpack.c.l.b16 %v909
        %v1429 = vunpack.c.l.b16 %v910
        %v1430 = vunpack.c.l.b16 %v911
        %v1431 = vunpack.c.l.b16 %v912
        %v1432 = vunpack.c.l.b16 %v913
        %v1433 = vunpack.c.l.b16 %v914
        %v1434 = vunpack.c.l.b16 %v915
        %v1435 = vunpack.c.l.b16 %v916
        %v1436 = vunpack.c.l.b16 %v917
        %v1437 = vunpack.c.l.b16 %v918
        %v1438 = vunpack.c.l.b16 %v919
        %v1439 = vunpack.c.l.b16 %v920
        %v1440 = vunpack.c.l.b16 %v921
        %v1441 = vunpack.c.l.b16 %v922
        %v1442 = vunpack.c.l.b16 %v923
        %v1443 = vunpack.c.l.b16 %v924
        %v1444 = vunpack.c.l.b16 %v925
        %v1445 = vunpack.c.l.b16 %v926
        %v1446 = vunpack.c.l.b16 %v927
        %v1447 = vunpack.c.l.b16 %v928
        %v1448 = vunpack.c.l.b16 %v929
        %v1449 = vunpack.c.l.b16 %v930
        %v1450 = vunpack.c.l.b16 %v931
        %v1451 = vunpack.c.l.b16 %v932
        %v1452 = vunpack.c.l.b16 %v933
        %v1453 = vunpack.c.l.b16 %v934
        %v1454 = vunpack.c.l.b16 %v935
        %v1455 = vunpack.c.l.b16 %v936
        %v1456 = vunpack.c.l.b16 %v937
        %v1457 = vunpack.c.l.b16 %v938
        %v1458 = vunpack.c.l.b16 %v939
        %v1459 = vunpack.c.l.b16 %v940
        %v1460 = vunpack.c.l.b16 %v941
        %v1461 = vunpack.c.l.b16 %v942
        %v1462 = vunpack.c.l.b16 %v943
        %v1463 = vunpack.c.l.b16 %v944
        %v1464 = vunpack.c.l.b16 %v945
        %v1465 = vunpack.c.l.b16 %v946
        %v1466 = vunpack.c.l.b16 %v947
        %v1467 = vunpack.c.l.b16 %v948
        %v1468 = vunpack.c.l.b16 %v949
        %v1469 = vunpack.c.l.b16 %v950
        %v1470 = vunpack.c.l.b16 %v951
        %v1471 = vunpack.c.l.b16 %v952
        %v1472 = vunpack.c.l.b16 %v953
        %v1473 = vunpack.c.l.b16 %v954
        %v1474 = vunpack.c.l.b16 %v955
        %v1475 = vunpack.c.l.b16 %v956
        %v1476 = vunpack.c.l.b16 %v957
        %v1477 = vunpack.c.l.b16 %v958
        %v1478 = vunpack.c.l.b16 %v959
        %v1479 = vunpack.c.l.b16 %v960
        %v1480 = vunpack.c.l.b16 %v961
        %v1481 = vunpack.c.l.b16 %v962
        %v1482 = vunpack.c.l.b16 %v963
        %v1483 = vunpack.c.l.b16 %v964
        %v1484 = vunpack.c.l.b16 %v965
        %v1485 = vunpack.c.l.b16 %v966
        %v1486 = vunpack.c.l.b16 %v967
        %v1487 = vunpack.c.l.b16 %v968
        %v1488 = vunpack.c.l.b16 %v969
        %v1489 = vunpack.c.l.b16 %v970
        %v1490 = vunpack.c.l.b16 %v971
        %v1491 = vunpack.c.l.b16 %v972
        %v1492 = vunpack.c.l.b16 %v973
        %v1493 = vunpack.c.l.b16 %v974
        %v1494 = vunpack.c.l.b16 %v975
        %v1495 = vunpack.c.l.b16 %v976
        %v1496 = vunpack.c.l.b16 %v977
        %v1497 = vunpack.c.l.b16 %v978
        %v1498 = vunpack.c.l.b16 %v979
        %v1499 = vunpack.c.l.b16 %v980
        %v1500 = vunpack.c.l.b16 %v981
        %v1501 = vunpack.c.l.b16 %v982
        %v1502 = vunpack.c.l.b16 %v983
        %v1503 = vunpack.c.l.b16 %v984
        %v1504 = vunpack.c.l.b16 %v985
        %v1505 = vunpack.c.l.b16 %v986
        %v1506 = vunpack.c.l.b16 %v987
        %v1507 = vunpack.c.l.b16 %v988
        %v1508 = vunpack.c.l.b16 %v989
        %v1509 = vunpack.c.l.b16 %v990
        %v1510 = vunpack.c.l.b16 %v991
        %v1511 = vunpack.c.l.b16 %v992
        %v1512 = vunpack.c.l.b16 %v993
        %v1513 = vunpack.c.l.b16 %v994
        %v1514 = vunpack.c.l.b16 %v995
        %v1515 = vunpack.c.l.b16 %v996
        %v1516 = vunpack.c.l.b16 %v997
        %v1517 = vunpack.c.l.b16 %v998
        %v1518 = vunpack.c.l.b16 %v999
        %v1519 = vunpack.c.l.b16 %v1000
        %v1520 = vunpack.c.l.b16 %v1001
        %v1521 = vunpack.c.l.b16 %v1002
        %v1522 = vunpack.c.l.b16 %v1003
        %v1523 = vunpack.c.l.b16 %v1004
        %v1524 = vunpack.c.l.b16 %v1005
        %v1525 = vunpack.c.l.b16 %v1006
        %v1526 = vunpack.c.l.b16 %v1007
        %v1527 = vunpack.c.l.b16 %v1008
        %v1528 = vunpack.c.l.b16 %v1009
        %v1529 = vunpack.c.l.b16 %v1010
        %v1530 = vunpack.c.l.b16 %v1011
        %v1531 = vunpack.c.l.b16 %v1012
        %v1532 = vunpack.c.l.b16 %v1013
        %v1533 = vunpack.c.l.b16 %v1014
        %v1534 = vunpack.c.l.b16 %v1015
        %v1535 = vunpack.c.l.b16 %v1016
        %v1536 = vunpack.c.l.b16 %v1017
        %v1537 = vunpack.c.l.b16 %v1018
        %v1538 = vunpack.c.l.b16 %v1019
        %v1539 = vunpack.c.l.b16 %v1020
        %v1540 = vunpack.c.l.b16 %v1021
        %v1541 = vunpack.c.l.b16 %v1022
        %v1542 = vunpack.c.l.b16 %v1023
        %v1543 = vunpack.c.l.b16 %v1024
        %v1544 = vunpack.c.l.b16 %v1025
        %v1545 = vunpack.c.l.b16 %v1026
        %v1546 = vunpack.c.l.b16 %v1027
        %v1547 = vunpack.c.l.b16 %v1028
        %v1548 = vunpack.c.l.b16 %v1029
        %v1549 = vunpack.c.l.b16 %v1030
        %v1550 = vunpack.c.l.b16 %v1031
        %v1551 = vunpack.c.l.b16 %v1032
        %v1552 = vunpack.c.l.b16 %v1033
        %v1553 = vunpack.c.l.b16 %v1034
        %v1554 = vunpack.c.l.b16 %v1035
        %v1555 = vunpack.c.l.b16 %v1036
        %v1556 = vunpack.c.l.b16 %v1037
        %v1557 = vunpack.c.l.b16 %v1038
        %v1558 = vunpack.c.l.b16 %v1039
        %v1559 = vunpack.c.l.b16 %v1040
        %v1560 = vunpack.c.l.b16 %v1041
        %v1561 = vunpack.c.l.b16 %v1042
        %v1562 = vunpack.c.l.b16 %v1043
        %v1563 = vunpack.c.l.b16 %v1044
        %v1564 = vunpack.c.l.b16 %v1045
        %v1565 = vunpack.c.l.b16 %v1046
        %v1566 = vunpack.c.l.b16 %v1047
        %v1567 = vunpack.c.l.b16 %v1048
        %v1568 = vunpack.c.l.b16 %v1049
        %v1569 = vunpack.c.l.b16 %v1050
        %v1570 = vunpack.c.l.b16 %v1051
        %v1571 = vunpack.c.l.b16 %v1052
        %v1572 = vunpack.c.l.b16 %v1053
        %v1573 = vunpack.c.l.b16 %v1054
        %v1574 = vunpack.c.l.b16 %v1055
        %v1575 = vunpack.c.l.b16 %v1056
        %v1576 = vunpack.c.l.b16 %v1057
        %v1577 = vunpack.c.l.b16 %v1058
        %v1578 = vunpack.c.l.b16 %v1059
        %v1579 = vunpack.c.l.b16 %v1060
        %v1580 = vunpack.c.l.b16 %v1061
        %v1581 = vunpack.c.l.b16 %v1062
        %v1582 = vunpack.c.l.b16 %v1063
        %v1583 = vunpack.c.l.b16 %v1064
        %v1584 = vunpack.c.l.b16 %v1065
        %v1585 = vunpack.c.l.b16 %v1066
        %v1586 = vunpack.c.l.b16 %v1067
        %v1587 = vunpack.c.l.b16 %v1068
        %v1588 = vunpack.c.l.b16 %v1069
        %v1589 = vunpack.c.l.b16 %v1070
        %v1590 = vunpack.c.l.b16 %v1071
        %v1591 = vunpack.c.l.b16 %v1072
        %v1592 = vunpack.c.l.b16 %v1073
        %v1593 = vunpack.c.l.b16 %v1074
        %v1594 = vunpack.c.l.b16 %v1075
        %v1595 = vunpack.c.l.b16 %v1076
        %v1596 = vunpack.c.l.b16 %v1077
        %v1597 = vunpack.c.l.b16 %v1078
        %v1598 = vunpack.c.l.b16 %v1079
        %v1599 = vunpack.c.l.b16 %v1080
        %v1600 = vunpack.c.l.b16 %v1081
        %v1601 = vunpack.c.l.b16 %v1082
        %v1602 = vunpack.c.l.b16 %v1083
        %v1603 = vunpack.c.l.b16 %v1084
        %v1604 = vunpack.c.l.b16 %v1085
        %v1605 = vunpack.c.l.b16 %v1086
        %v1606 = vunpack.c.l.b16 %v1087
        %v1607 = vunpack.c.l.b16 %v1088
        %v1608 = vunpack.c.l.b16 %v1089
        %v1609 = vunpack.c.l.b16 %v1090
        %v1610 = vunpack.c.l.b16 %v1091
        %v1611 = vunpack.c.l.b16 %v1092
        %v1612 = vunpack.c.l.b16 %v1093
        %v1613 = vunpack.c.l.b16 %v1094
        %v1614 = vunpack.c.l.b16 %v1095
        %v1615 = vunpack.c.l.b16 %v1096
        %v1616 = vunpack.c.l.b16 %v1097
        %v1617 = vunpack.c.l.b16 %v1098
        %v1618 = vunpack.c.l.b16 %v1099
        %v1619 = vunpack.c.l.b16 %v1100
        %v1620 = vunpack.c.l.b16 %v1101
        %v1621 = vunpack.c.l.b16 %v1102
        %v1622 = vunpack.c.l.b16 %v1103
        %v1623 = vunpack.c.l.b16 %v1104
        %v1624 = vunpack.c.l.b16 %v1105
        %v1625 = vunpack.c.l.b16 %v1106
        %v1626 = vunpack.c.l.b16 %v1107
        %v1627 = vunpack.c.l.b16 %v1108
        %v1628 = vunpack.c.l.b16 %v1109
        %v1629 = vunpack.c.l.b16 %v1110
        %v1630 = vunpack.c.l.b16 %v1111
        %v1631 = vunpack.c.l.b16 %v1112
        %v1632 = vunpack.c.l.b16 %v1113
        %v1633 = vunpack.c.l.b16 %v1114
        %v1634 = vunpack.c.l.b16 %v1115
        %v1635 = vunpack.c.l.b16 %v1116
        %v1636 = vunpack.c.l.b16 %v1117
        %v1637 = vpack.c.b16 %v1382, %v1381
        %v1638 = vpack.c.b16 %v1384, %v1383
        %v1639 = vpack.c.b16 %v1386, %v1385
        %v1640 = vpack.c.b16 %v1388, %v1387
        %v1641 = vpack.c.b16 %v1390, %v1389
        %v1642 = vpack.c.b16 %v1392, %v1391
        %v1643 = vpack.c.b16 %v1394, %v1393
        %v1644 = vpack.c.b16 %v1396, %v1395
        %v1645 = vpack.c.b16 %v1398, %v1397
        %v1646 = vpack.c.b16 %v1400, %v1399
        %v1647 = vpack.c.b16 %v1402, %v1401
        %v1648 = vpack.c.b16 %v1404, %v1403
        %v1649 = vpack.c.b16 %v1406, %v1405
        %v1650 = vpack.c.b16 %v1408, %v1407
        %v1651 = vpack.c.b16 %v1410, %v1409
        %v1652 = vpack.c.b16 %v1412, %v1411
        %v1653 = vpack.c.b16 %v1414, %v1413
        %v1654 = vpack.c.b16 %v1416, %v1415
        %v1655 = vpack.c.b16 %v1418, %v1417
        %v1656 = vpack.c.b16 %v1420, %v1419
        %v1657 = vpack.c.b16 %v1422, %v1421
        %v1658 = vpack.c.b16 %v1424, %v1423
        %v1659 = vpack.c.b16 %v1426, %v1425
        %v1660 = vpack.c.b16 %v1428, %v1427
        %v1661 = vpack.c.b16 %v1430, %v1429
        %v1662 = vpack.c.b16 %v1432, %v1431
        %v1663 = vpack.c.b16 %v1434, %v1433
        %v1664 = vpack.c.b16 %v1436, %v1435
        %v1665 = vpack.c.b16 %v1438, %v1437
        %v1666 = vpack.c.b16 %v1440, %v1439
        %v1667 = vpack.c.b16 %v1442, %v1441
        %v1668 = vpack.c.b16 %v1444, %v1443
        %v1669 = vpack.c.b16 %v1446, %v1445
        %v1670 = vpack.c.b16 %v1448, %v1447
        %v1671 = vpack.c.b16 %v1450, %v1449
        %v1672 = vpack.c.b16 %v1452, %v1451
        %v1673 = vpack.c.b16 %v1454, %v1453
        %v1674 = vpack.c.b16 %v1456, %v1455
        %v1675 = vpack.c.b16 %v1458, %v1457
        %v1676 = vpack.c.b16 %v1460, %v1459
        %v1677 = vpack.c.b16 %v1462, %v1461
        %v1678 = vpack.c.b16 %v1464, %v1463
        %v1679 = vpack.c.b16 %v1466, %v1465
        %v1680 = vpack.c.b16 %v1468, %v1467
        %v1681 = vpack.c.b16 %v1470, %v1469
        %v1682 = vpack.c.b16 %v1472, %v1471
        %v1683 = vpack.c.b16 %v1474, %v1473
        %v1684 = vpack.c.b16 %v1476, %v1475
        %v1685 = vpack.c.b16 %v1478, %v1477
        %v1686 = vpack.c.b16 %v1480, %v1479
        %v1687 = vpack.c.b16 %v1482, %v1481
        %v1688 = vpack.c.b16 %v1484, %v1483
        %v1689 = vpack.c.b16 %v1486, %v1485
        %v1690 = vpack.c.b16 %v1488, %v1487
        %v1691 = vpack.c.b16 %v1490, %v1489
        %v1692 = vpack.c.b16 %v1492, %v1491
        %v1693 = vpack.c.b16 %v1494, %v1493
        %v1694 = vpack.c.b16 %v1496, %v1495
        %v1695 = vpack.c.b16 %v1498, %v1497
        %v1696 = vpack.c.b16 %v1500, %v1499
        %v1697 = vpack.c.b16 %v1502, %v1501
        %v1698 = vpack.c.b16 %v1504, %v1503
        %v1699 = vpack.c.b16 %v1506, %v1505
        %v1700 = vpack.c.b16 %v1508, %v1507
        %v1701 = vpack.c.b16 %v1510, %v1509
        %v1702 = vpack.c.b16 %v1512, %v1511
        %v1703 = vpack.c.b16 %v1514, %v1513
        %v1704 = vpack.c.b16 %v1516, %v1515
        %v1705 = vpack.c.b16 %v1518, %v1517
        %v1706 = vpack.c.b16 %v1520, %v1519
        %v1707 = vpack.c.b16 %v1522, %v1521
        %v1708 = vpack.c.b16 %v1524, %v1523
        %v1709 = vpack.c.b16 %v1526, %v1525
        %v1710 = vpack.c.b16 %v1528, %v1527
        %v1711 = vpack.c.b16 %v1530, %v1529
        %v1712 = vpack.c.b16 %v1532, %v1531
        %v1713 = vpack.c.b16 %v1534, %v1533
        %v1714 = vpack.c.b16 %v1536, %v1535
        %v1715 = vpack.c.b16 %v1538, %v1537
        %v1716 = vpack.c.b16 %v1540, %v1539
        %v1717 = vpack.c.b16 %v1542, %v1541
        %v1718 = vpack.c.b16 %v1544, %v1543
        %v1719 = vpack.c.b16 %v1546, %v1545
        %v1720 = vpack.c.b16 %v1548, %v1547
        %v1721 = vpack.c.b16 %v1550, %v1549
        %v1722 = vpack.c.b16 %v1552, %v1551
        %v1723 = vpack.c.b16 %v1554, %v1553
        %v1724 = vpack.c.b16 %v1556, %v1555
        %v1725 = vpack.c.b16 %v1558, %v1557
        %v1726 = vpack.c.b16 %v1560, %v1559
        %v1727 = vpack.c.b16 %v1562, %v1561
        %v1728 = vpack.c.b16 %v1564, %v1563
        %v1729 = vpack.c.b16 %v1566, %v1565
        %v1730 = vpack.c.b16 %v1568, %v1567
        %v1731 = vpack.c.b16 %v1570, %v1569
        %v1732 = vpack.c.b16 %v1572, %v1571
        %v1733 = vpack.c.b16 %v1574, %v1573
        %v1734 = vpack.c.b16 %v1576, %v1575
        %v1735 = vpack.c.b16 %v1578, %v1577
        %v1736 = vpack.c.b16 %v1580, %v1579
        %v1737 = vpack.c.b16 %v1582, %v1581
        %v1738 = vpack.c.b16 %v1584, %v1583
        %v1739 = vpack.c.b16 %v1586, %v1585
        %v1740 = vpack.c.b16 %v1588, %v1587
        %v1741 = vpack.c.b16 %v1590, %v1589
        %v1742 = vpack.c.b16 %v1592, %v1591
        %v1743 = vpack.c.b16 %v1594, %v1593
        %v1744 = vpack.c.b16 %v1596, %v1595
        %v1745 = vpack.c.b16 %v1598, %v1597
        %v1746 = vpack.c.b16 %v1600, %v1599
        %v1747 = vpack.c.b16 %v1602, %v1601
        %v1748 = vpack.c.b16 %v1604, %v1603
        %v1749 = vpack.c.b16 %v1606, %v1605
        %v1750 = vpack.c.b16 %v1608, %v1607
        %v1751 = vpack.c.b16 %v1610, %v1609
        %v1752 = vpack.c.b16 %v1612, %v1611
        %v1753 = vpack.c.b16 %v1614, %v1613
        %v1754 = vpack.c.b16 %v1616, %v1615
        %v1755 = vpack.c.b16 %v1618, %v1617
        %v1756 = vpack.c.b16 %v1620, %v1619
        %v1757 = vpack.c.b16 %v1622, %v1621
        %v1758 = vpack.c.b16 %v1624, %v1623
        %v1759 = vpack.c.b16 %v1626, %v1625
        %v1760 = vpack.c.b16 %v1628, %v1627
        %v1761 = vpack.c.b16 %v1630, %v1629
        %v1762 = vpack.c.b16 %v1632, %v1631
        %v1763 = vpack.c.b16 %v1634, %v1633
        %v1764 = vpack.c.b16 %v1636, %v1635
        %1893 = vmatprep.subr.bf16.mxu0 0
        %1894 = vmatpush1.bf16.msra.mxu0 %v1644
        %1895 = vmatprep.subr.bf16.mxu0 0
        %1896 = vmatpush1.bf16.msra.mxu0 %v1643
        %1897 = vmatprep.subr.bf16.mxu0 0
        %1898 = vmatpush1.bf16.msra.mxu0 %v1642
        %1899 = vmatprep.subr.bf16.mxu0 0
        %1900 = vmatpush1.bf16.msra.mxu0 %v1641
        %1901 = vmatprep.subr.bf16.mxu0 0
        %1902 = vmatpush1.bf16.msra.mxu0 %v1640
        %1903 = vmatprep.subr.bf16.mxu0 0
        %1904 = vmatpush1.bf16.msra.mxu0 %v1639
        %1905 = vmatprep.subr.bf16.mxu0 0
        %1906 = vmatpush1.bf16.msra.mxu0 %v1638
        %1907 = vmatprep.subr.bf16.mxu0 0
        %1908 = vmatpush1.bf16.msra.mxu0 %v1637
        %1909 = vmatprep.subr.bf16.mxu0 0
        %1910 = vmatpush2.bf16.msra.mxu0 %v1652
        %1911 = vmatprep.subr.bf16.mxu0 0
        %1912 = vmatpush2.bf16.msra.mxu0 %v1651
        %1913 = vmatprep.subr.bf16.mxu0 0
        %1914 = vmatpush2.bf16.msra.mxu0 %v1650
        %1915 = vmatprep.subr.bf16.mxu0 0
        %1916 = vmatpush2.bf16.msra.mxu0 %v1649
        %1917 = vmatprep.subr.bf16.mxu0 0
        %1918 = vmatpush2.bf16.msra.mxu0 %v1648
        %1919 = vmatprep.subr.bf16.mxu0 0
        %1920 = vmatpush2.bf16.msra.mxu0 %v1647
        %1921 = vmatprep.subr.bf16.mxu0 0
        %1922 = vmatpush2.bf16.msra.mxu0 %v1646
        %1923 = vmatprep.subr.bf16.mxu0 0
        %1924 = vmatpush2.bf16.msra.mxu0 %v1645
        %1925 = vmatprep.mubr.bf16.mxu0 %v847
        %1926 = vmatmul.mubr.bf16.gmra.mxu0 %v846
        %v1927 = vpop.f32.mrf.mxu0
        %v1928 = vadd.f32 %v1123, %v1927
        %v1929 = vpop.f32.mrf.mxu0
        %v1930 = vpop.f32.mrf.mxu0
        %v1931 = vpop.f32.mrf.mxu0
        %1932 = vdwg.mxu0
        %1933 = vmatprep.subr.bf16.mxu0 0
        %1934 = vmatpush1.bf16.msra.mxu0 %v1660
        %1935 = vmatprep.subr.bf16.mxu0 0
        %1936 = vmatpush1.bf16.msra.mxu0 %v1659
        %1937 = vmatprep.subr.bf16.mxu0 0
        %1938 = vmatpush1.bf16.msra.mxu0 %v1658
        %1939 = vmatprep.subr.bf16.mxu0 0
        %1940 = vmatpush1.bf16.msra.mxu0 %v1657
        %1941 = vmatprep.subr.bf16.mxu0 0
        %1942 = vmatpush1.bf16.msra.mxu0 %v1656
        %1943 = vmatprep.subr.bf16.mxu0 0
        %1944 = vmatpush1.bf16.msra.mxu0 %v1655
        %1945 = vmatprep.subr.bf16.mxu0 0
        %1946 = vmatpush1.bf16.msra.mxu0 %v1654
        %1947 = vmatprep.subr.bf16.mxu0 0
        %1948 = vmatpush1.bf16.msra.mxu0 %v1653
        %1949 = vmatprep.subr.bf16.mxu0 0
        %1950 = vmatpush2.bf16.msra.mxu0 %v1668
        %1951 = vmatprep.subr.bf16.mxu0 0
        %1952 = vmatpush2.bf16.msra.mxu0 %v1667
        %1953 = vmatprep.subr.bf16.mxu0 0
        %1954 = vmatpush2.bf16.msra.mxu0 %v1666
        %1955 = vmatprep.subr.bf16.mxu0 0
        %1956 = vmatpush2.bf16.msra.mxu0 %v1665
        %1957 = vmatprep.subr.bf16.mxu0 0
        %1958 = vmatpush2.bf16.msra.mxu0 %v1664
        %1959 = vmatprep.subr.bf16.mxu0 0
        %1960 = vmatpush2.bf16.msra.mxu0 %v1663
        %1961 = vmatprep.subr.bf16.mxu0 0
        %1962 = vmatpush2.bf16.msra.mxu0 %v1662
        %1963 = vmatprep.subr.bf16.mxu0 0
        %1964 = vmatpush2.bf16.msra.mxu0 %v1661
        %1965 = vmatprep.mubr.bf16.mxu0 %v849
        %1966 = vmatmul.mubr.bf16.gmra.mxu0 %v848
        %v1967 = vpop.f32.mrf.mxu0
        %v1968 = vadd.f32 %v1928, %v1967
        %v1969 = vpop.f32.mrf.mxu0
        %v1970 = vpop.f32.mrf.mxu0
        %v1971 = vpop.f32.mrf.mxu0
        %1972 = vdwg.mxu0
        %1973 = vmatprep.subr.bf16.mxu0 0
        %1974 = vmatpush1.bf16.msra.mxu0 %v1676
        %1975 = vmatprep.subr.bf16.mxu0 0
        %1976 = vmatpush1.bf16.msra.mxu0 %v1675
        %1977 = vmatprep.subr.bf16.mxu0 0
        %1978 = vmatpush1.bf16.msra.mxu0 %v1674
        %1979 = vmatprep.subr.bf16.mxu0 0
        %1980 = vmatpush1.bf16.msra.mxu0 %v1673
        %1981 = vmatprep.subr.bf16.mxu0 0
        %1982 = vmatpush1.bf16.msra.mxu0 %v1672
        %1983 = vmatprep.subr.bf16.mxu0 0
        %1984 = vmatpush1.bf16.msra.mxu0 %v1671
        %1985 = vmatprep.subr.bf16.mxu0 0
        %1986 = vmatpush1.bf16.msra.mxu0 %v1670
        %1987 = vmatprep.subr.bf16.mxu0 0
        %1988 = vmatpush1.bf16.msra.mxu0 %v1669
        %1989 = vmatprep.subr.bf16.mxu0 0
        %1990 = vmatpush2.bf16.msra.mxu0 %v1684
        %1991 = vmatprep.subr.bf16.mxu0 0
        %1992 = vmatpush2.bf16.msra.mxu0 %v1683
        %1993 = vmatprep.subr.bf16.mxu0 0
        %1994 = vmatpush2.bf16.msra.mxu0 %v1682
        %1995 = vmatprep.subr.bf16.mxu0 0
        %1996 = vmatpush2.bf16.msra.mxu0 %v1681
        %1997 = vmatprep.subr.bf16.mxu0 0
        %1998 = vmatpush2.bf16.msra.mxu0 %v1680
        %1999 = vmatprep.subr.bf16.mxu0 0
        %2000 = vmatpush2.bf16.msra.mxu0 %v1679
        %2001 = vmatprep.subr.bf16.mxu0 0
        %2002 = vmatpush2.bf16.msra.mxu0 %v1678
        %2003 = vmatprep.subr.bf16.mxu0 0
        %2004 = vmatpush2.bf16.msra.mxu0 %v1677
        %2005 = vmatprep.mubr.bf16.mxu0 %v851
        %2006 = vmatmul.mubr.bf16.gmra.mxu0 %v850
        %v2007 = vpop.f32.mrf.mxu0
        %v2008 = vadd.f32 %v1968, %v2007
        %v2009 = vpop.f32.mrf.mxu0
        %v2010 = vpop.f32.mrf.mxu0
        %v2011 = vpop.f32.mrf.mxu0
        %2012 = vdwg.mxu0
        %2013 = vmatprep.subr.bf16.mxu0 0
        %2014 = vmatpush1.bf16.msra.mxu0 %v1692
        %2015 = vmatprep.subr.bf16.mxu0 0
        %2016 = vmatpush1.bf16.msra.mxu0 %v1691
        %2017 = vmatprep.subr.bf16.mxu0 0
        %2018 = vmatpush1.bf16.msra.mxu0 %v1690
        %2019 = vmatprep.subr.bf16.mxu0 0
        %2020 = vmatpush1.bf16.msra.mxu0 %v1689
        %2021 = vmatprep.subr.bf16.mxu0 0
        %2022 = vmatpush1.bf16.msra.mxu0 %v1688
        %2023 = vmatprep.subr.bf16.mxu0 0
        %2024 = vmatpush1.bf16.msra.mxu0 %v1687
        %2025 = vmatprep.subr.bf16.mxu0 0
        %2026 = vmatpush1.bf16.msra.mxu0 %v1686
        %2027 = vmatprep.subr.bf16.mxu0 0
        %2028 = vmatpush1.bf16.msra.mxu0 %v1685
        %2029 = vmatprep.subr.bf16.mxu0 0
        %2030 = vmatpush2.bf16.msra.mxu0 %v1700
        %2031 = vmatprep.subr.bf16.mxu0 0
        %2032 = vmatpush2.bf16.msra.mxu0 %v1699
        %2033 = vmatprep.subr.bf16.mxu0 0
        %2034 = vmatpush2.bf16.msra.mxu0 %v1698
        %2035 = vmatprep.subr.bf16.mxu0 0
        %2036 = vmatpush2.bf16.msra.mxu0 %v1697
        %2037 = vmatprep.subr.bf16.mxu0 0
        %2038 = vmatpush2.bf16.msra.mxu0 %v1696
        %2039 = vmatprep.subr.bf16.mxu0 0
        %2040 = vmatpush2.bf16.msra.mxu0 %v1695
        %2041 = vmatprep.subr.bf16.mxu0 0
        %2042 = vmatpush2.bf16.msra.mxu0 %v1694
        %2043 = vmatprep.subr.bf16.mxu0 0
        %2044 = vmatpush2.bf16.msra.mxu0 %v1693
        %2045 = vmatprep.mubr.bf16.mxu0 %v853
        %2046 = vmatmul.mubr.bf16.gmra.mxu0 %v852
        %v2047 = vpop.f32.mrf.mxu0
        %v2048 = vadd.f32 %v2008, %v2047
        %v2049 = vpop.f32.mrf.mxu0
        %v2050 = vpop.f32.mrf.mxu0
        %v2051 = vpop.f32.mrf.mxu0
        %2052 = vdwg.mxu0
        %2053 = vmatprep.subr.bf16.mxu0 0
        %2054 = vmatpush1.bf16.msra.mxu0 %v1708
        %2055 = vmatprep.subr.bf16.mxu0 0
        %2056 = vmatpush1.bf16.msra.mxu0 %v1707
        %2057 = vmatprep.subr.bf16.mxu0 0
        %2058 = vmatpush1.bf16.msra.mxu0 %v1706
        %2059 = vmatprep.subr.bf16.mxu0 0
        %2060 = vmatpush1.bf16.msra.mxu0 %v1705
        %2061 = vmatprep.subr.bf16.mxu0 0
        %2062 = vmatpush1.bf16.msra.mxu0 %v1704
        %2063 = vmatprep.subr.bf16.mxu0 0
        %2064 = vmatpush1.bf16.msra.mxu0 %v1703
        %2065 = vmatprep.subr.bf16.mxu0 0
        %2066 = vmatpush1.bf16.msra.mxu0 %v1702
        %2067 = vmatprep.subr.bf16.mxu0 0
        %2068 = vmatpush1.bf16.msra.mxu0 %v1701
        %2069 = vmatprep.subr.bf16.mxu0 0
        %2070 = vmatpush2.bf16.msra.mxu0 %v1716
        %2071 = vmatprep.subr.bf16.mxu0 0
        %2072 = vmatpush2.bf16.msra.mxu0 %v1715
        %2073 = vmatprep.subr.bf16.mxu0 0
        %2074 = vmatpush2.bf16.msra.mxu0 %v1714
        %2075 = vmatprep.subr.bf16.mxu0 0
        %2076 = vmatpush2.bf16.msra.mxu0 %v1713
        %2077 = vmatprep.subr.bf16.mxu0 0
        %2078 = vmatpush2.bf16.msra.mxu0 %v1712
        %2079 = vmatprep.subr.bf16.mxu0 0
        %2080 = vmatpush2.bf16.msra.mxu0 %v1711
        %2081 = vmatprep.subr.bf16.mxu0 0
        %2082 = vmatpush2.bf16.msra.mxu0 %v1710
        %2083 = vmatprep.subr.bf16.mxu0 0
        %2084 = vmatpush2.bf16.msra.mxu0 %v1709
        %2085 = vmatprep.mubr.bf16.mxu0 %v855
        %2086 = vmatmul.mubr.bf16.gmra.mxu0 %v854
        %v2087 = vpop.f32.mrf.mxu0
        %v2088 = vadd.f32 %v2048, %v2087
        %v2089 = vpop.f32.mrf.mxu0
        %v2090 = vpop.f32.mrf.mxu0
        %v2091 = vpop.f32.mrf.mxu0
        %2092 = vdwg.mxu0
        %2093 = vmatprep.subr.bf16.mxu0 0
        %2094 = vmatpush1.bf16.msra.mxu0 %v1724
        %2095 = vmatprep.subr.bf16.mxu0 0
        %2096 = vmatpush1.bf16.msra.mxu0 %v1723
        %2097 = vmatprep.subr.bf16.mxu0 0
        %2098 = vmatpush1.bf16.msra.mxu0 %v1722
        %2099 = vmatprep.subr.bf16.mxu0 0
        %2100 = vmatpush1.bf16.msra.mxu0 %v1721
        %2101 = vmatprep.subr.bf16.mxu0 0
        %2102 = vmatpush1.bf16.msra.mxu0 %v1720
        %2103 = vmatprep.subr.bf16.mxu0 0
        %2104 = vmatpush1.bf16.msra.mxu0 %v1719
        %2105 = vmatprep.subr.bf16.mxu0 0
        %2106 = vmatpush1.bf16.msra.mxu0 %v1718
        %2107 = vmatprep.subr.bf16.mxu0 0
        %2108 = vmatpush1.bf16.msra.mxu0 %v1717
        %2109 = vmatprep.subr.bf16.mxu0 0
        %2110 = vmatpush2.bf16.msra.mxu0 %v1732
        %2111 = vmatprep.subr.bf16.mxu0 0
        %2112 = vmatpush2.bf16.msra.mxu0 %v1731
        %2113 = vmatprep.subr.bf16.mxu0 0
        %2114 = vmatpush2.bf16.msra.mxu0 %v1730
        %2115 = vmatprep.subr.bf16.mxu0 0
        %2116 = vmatpush2.bf16.msra.mxu0 %v1729
        %2117 = vmatprep.subr.bf16.mxu0 0
        %2118 = vmatpush2.bf16.msra.mxu0 %v1728
        %2119 = vmatprep.subr.bf16.mxu0 0
        %2120 = vmatpush2.bf16.msra.mxu0 %v1727
        %2121 = vmatprep.subr.bf16.mxu0 0
        %2122 = vmatpush2.bf16.msra.mxu0 %v1726
        %2123 = vmatprep.subr.bf16.mxu0 0
        %2124 = vmatpush2.bf16.msra.mxu0 %v1725
        %2125 = vmatprep.mubr.bf16.mxu0 %v857
        %2126 = vmatmul.mubr.bf16.gmra.mxu0 %v856
        %v2127 = vpop.f32.mrf.mxu0
        %v2128 = vadd.f32 %v2088, %v2127
        %v2129 = vpop.f32.mrf.mxu0
        %v2130 = vpop.f32.mrf.mxu0
        %v2131 = vpop.f32.mrf.mxu0
        %2132 = vdwg.mxu0
        %2133 = vmatprep.subr.bf16.mxu0 0
        %2134 = vmatpush1.bf16.msra.mxu0 %v1740
        %2135 = vmatprep.subr.bf16.mxu0 0
        %2136 = vmatpush1.bf16.msra.mxu0 %v1739
        %2137 = vmatprep.subr.bf16.mxu0 0
        %2138 = vmatpush1.bf16.msra.mxu0 %v1738
        %2139 = vmatprep.subr.bf16.mxu0 0
        %2140 = vmatpush1.bf16.msra.mxu0 %v1737
        %2141 = vmatprep.subr.bf16.mxu0 0
        %2142 = vmatpush1.bf16.msra.mxu0 %v1736
        %2143 = vmatprep.subr.bf16.mxu0 0
        %2144 = vmatpush1.bf16.msra.mxu0 %v1735
        %2145 = vmatprep.subr.bf16.mxu0 0
        %2146 = vmatpush1.bf16.msra.mxu0 %v1734
        %2147 = vmatprep.subr.bf16.mxu0 0
        %2148 = vmatpush1.bf16.msra.mxu0 %v1733
        %2149 = vmatprep.subr.bf16.mxu0 0
        %2150 = vmatpush2.bf16.msra.mxu0 %v1748
        %2151 = vmatprep.subr.bf16.mxu0 0
        %2152 = vmatpush2.bf16.msra.mxu0 %v1747
        %2153 = vmatprep.subr.bf16.mxu0 0
        %2154 = vmatpush2.bf16.msra.mxu0 %v1746
        %2155 = vmatprep.subr.bf16.mxu0 0
        %2156 = vmatpush2.bf16.msra.mxu0 %v1745
        %2157 = vmatprep.subr.bf16.mxu0 0
        %2158 = vmatpush2.bf16.msra.mxu0 %v1744
        %2159 = vmatprep.subr.bf16.mxu0 0
        %2160 = vmatpush2.bf16.msra.mxu0 %v1743
        %2161 = vmatprep.subr.bf16.mxu0 0
        %2162 = vmatpush2.bf16.msra.mxu0 %v1742
        %2163 = vmatprep.subr.bf16.mxu0 0
        %2164 = vmatpush2.bf16.msra.mxu0 %v1741
        %2165 = vmatprep.mubr.bf16.mxu0 %v859
        %2166 = vmatmul.mubr.bf16.gmra.mxu0 %v858
        %v2167 = vpop.f32.mrf.mxu0
        %v2168 = vadd.f32 %v2128, %v2167
        %v2169 = vpop.f32.mrf.mxu0
        %v2170 = vpop.f32.mrf.mxu0
        %v2171 = vpop.f32.mrf.mxu0
        %2172 = vdwg.mxu0
        %2173 = vmatprep.subr.bf16.mxu0 0
        %2174 = vmatpush1.bf16.msra.mxu0 %v1756
        %2175 = vmatprep.subr.bf16.mxu0 0
        %2176 = vmatpush1.bf16.msra.mxu0 %v1755
        %2177 = vmatprep.subr.bf16.mxu0 0
        %2178 = vmatpush1.bf16.msra.mxu0 %v1754
        %2179 = vmatprep.subr.bf16.mxu0 0
        %2180 = vmatpush1.bf16.msra.mxu0 %v1753
        %2181 = vmatprep.subr.bf16.mxu0 0
        %2182 = vmatpush1.bf16.msra.mxu0 %v1752
        %2183 = vmatprep.subr.bf16.mxu0 0
        %2184 = vmatpush1.bf16.msra.mxu0 %v1751
        %2185 = vmatprep.subr.bf16.mxu0 0
        %2186 = vmatpush1.bf16.msra.mxu0 %v1750
        %2187 = vmatprep.subr.bf16.mxu0 0
        %2188 = vmatpush1.bf16.msra.mxu0 %v1749
        %2189 = vmatprep.subr.bf16.mxu0 0
        %2190 = vmatpush2.bf16.msra.mxu0 %v1764
        %2191 = vmatprep.subr.bf16.mxu0 0
        %2192 = vmatpush2.bf16.msra.mxu0 %v1763
        %2193 = vmatprep.subr.bf16.mxu0 0
        %2194 = vmatpush2.bf16.msra.mxu0 %v1762
        %2195 = vmatprep.subr.bf16.mxu0 0
        %2196 = vmatpush2.bf16.msra.mxu0 %v1761
        %2197 = vmatprep.subr.bf16.mxu0 0
        %2198 = vmatpush2.bf16.msra.mxu0 %v1760
        %2199 = vmatprep.subr.bf16.mxu0 0
        %2200 = vmatpush2.bf16.msra.mxu0 %v1759
        %2201 = vmatprep.subr.bf16.mxu0 0
        %2202 = vmatpush2.bf16.msra.mxu0 %v1758
        %2203 = vmatprep.subr.bf16.mxu0 0
        %2204 = vmatpush2.bf16.msra.mxu0 %v1757
        %2205 = vmatprep.mubr.bf16.mxu0 %v861
        %2206 = vmatmul.mubr.bf16.gmra.mxu0 %v860
        %v2207 = vpop.f32.mrf.mxu0
        %v2208 = vadd.f32 %v2168, %v2207
        %v2209 = vpop.f32.mrf.mxu0
        %v2210 = vpop.f32.mrf.mxu0
        %v2211 = vpop.f32.mrf.mxu0
        %2212 = vdwg.mxu0
        %2213 = vst.msk [vmem:[%s215] sm:$0xff] %vm498, %v2208
        %s2214 = sand.u32 %s137, 1
        %s2215 = scalar_lea.sflag [#allocation3], %s2214
        %s2216 = sand.u32 %s137, 1
        %s2217 = smul.addr %s2216, 8
        %s2218 = scalar_lea.vmem [#allocation2], %s2217
        // Predicated region
        $region41: #{tpu_custom_call.1} parent=39 // pred_check
          %p2219 = pneg %p147
        $region42: #{tpu_custom_call.1} parent=39 // pred_check_branch
          %2221 = sbr.rel (%p2219) target = $region44
        $region43: #{tpu_custom_call.1} parent=39 // pred_region
          %s2223 = ssub.s32 128, 128
          %2224 = vsyncadd %s2215, %s2223
          %s2225 = smul.addr %s19, 128
          %s2226 = scalar_lea.hbm %s5, %s2225
          %s2228 = sshll.u32 %s2218, 4
          %s2229 = int_to_ptr.vmem [resolvable:$true] %s2228
          %2231 = dma.vmem_to_hbm [thread:$0]  %s2229, 128, %s2226, %s2215
        $region44: #{tpu_custom_call.1} parent=39 // pred_fallthru
          _
      $region40: #{tpu_custom_call.1} parent=5 // pred_fallthru
        _
      %p2232 = scmp.le.s32.totalorder 2, %s14
      // Predicated region
      $region45: #{tpu_custom_call.1} parent=5 // pred_check
        %p2233 = pneg %p2232
      $region46: #{tpu_custom_call.1} parent=5 // pred_check_branch
        %2235 = sbr.rel (%p2233) target = $region48
      $region47: #{tpu_custom_call.1} parent=5 // pred_region
        %s2236 = ssub.s32 %s14, 2
        // Predicated region
        $region49: #{tpu_custom_call.1} parent=47 // pred_check
          %p2237 = pneg %p153
        $region50: #{tpu_custom_call.1} parent=47 // pred_check_branch
          %2239 = sbr.rel (%p2237) target = $region52
        $region51: #{tpu_custom_call.1} parent=47 // pred_region
          %s2240 = sand.u32 %s138, 1
          %s2241 = scalar_lea.sflag [#allocation3], %s2240
          %s2242 = sand.u32 %s138, 1
          %s2243 = smul.addr %s2242, 8
          %s2244 = scalar_lea.vmem [#allocation2], %s2243
          %2245 = dma.done %s2241, 128
        $region52: #{tpu_custom_call.1} parent=47 // pred_fallthru
          _
      $region48: #{tpu_custom_call.1} parent=5 // pred_fallthru
        _
    $region6: #{tpu_custom_call.1} parent=1 // loop_footer
      %s18 = sadd.s32 1, %s14
    $region7: #{tpu_custom_call.1} parent=1 // loop_footer_branch
      %13 = sbr.rel target = $region3
    $region8: #{tpu_custom_call.1} parent=1 // loop_exit
      _
    %2246 = vsyncpa [#allocation3], 1
    %s2247 = scalar_lea.sflag [#allocation3], 1
    %2248 = vsyncpa %s2247, 1

</llo_original>
